<compile_context>
chip_gen: v7x
topology: tpu7x:2x2x1
jax: 0.10.0
libtpu: 0.0.40
codegen_flags: <defaults>
</compile_context>

<pallas_src>
import functools

import jax
import jax.numpy as jnp
import numpy as np
from jax.experimental import pallas as pl
from jax.experimental.pallas import tpu as pltpu


def _round_up(x, m):
    return (x + m - 1) // m * m


def _pick_batch_tile(B):
    """Largest sublane-aligned batch tile that still yields >= 2 tiles."""
    if B % 8 != 0:
        return B
    for t in (512, 256, 128, 64, 32, 16, 8):
        if B % t == 0 and B // t >= 2:
            return t
    return B


# ----------------------------------------------------------------------------
# Parameter packing (done once at setup time, outside the kernel)
# ----------------------------------------------------------------------------
def pack_stacked_params(layer_params, d_in, d_hid, share,
                        *, matmul_dtype=jnp.bfloat16):
    """Fuse (W_ih, W_hh, W_sh, biases) of every layer into one pre-transposed,
    zero-padded, 128-lane-aligned matrix + bias per layer.

    Packed N layout (each gate gets a full pad(H)-wide, 128-aligned block):
        [ i | f | o | c_hat | b_0 | ... | b_{share-1} ]
    Packed K layout:
        [ layer input (x or previous h) | h_0[layer] | s_0[idx][layer] ]
    """
    H = d_hid
    hp = _round_up(H, 128)
    kin_p = _round_up(max(d_in, H), 128)
    kp = kin_p + 2 * hp
    n_out = (4 + share) * hp
    n_layers = len(layer_params)

    w_all = np.zeros((n_layers, kp, n_out), np.float32)
    b_all = np.zeros((n_layers, 1, n_out), np.float32)
    for li, p in enumerate(layer_params):
        w_ih = np.asarray(p["w_ih"], np.float32)   # ((4+share)H, d_in_l)
        w_hh = np.asarray(p["w_hh"], np.float32)   # (4H, H)
        w_sh = np.asarray(p["w_sh"], np.float32)   # (share*H, H)
        b_ih = np.asarray(p["b_ih"], np.float32)
        b_hh = np.asarray(p["b_hh"], np.float32)
        b_sh = np.asarray(p["b_sh"], np.float32)
        d_in_l = w_ih.shape[1]

        for g in range(4):                          # i, f, o, c_hat
            col = g * hp
            w_all[li, :d_in_l, col:col + H] = w_ih[g * H:(g + 1) * H].T
            w_all[li, kin_p:kin_p + H, col:col + H] = w_hh[g * H:(g + 1) * H].T
            b_all[li, 0, col:col + H] = (b_ih[g * H:(g + 1) * H]
                                         + b_hh[g * H:(g + 1) * H])
        for k in range(share):                      # shared b-gates
            col = (4 + k) * hp
            w_all[li, :d_in_l, col:col + H] = w_ih[(4 + k) * H:(5 + k) * H].T
            w_all[li, kin_p + hp:kin_p + hp + H, col:col + H] = \
                w_sh[k * H:(k + 1) * H].T
            b_all[li, 0, col:col + H] = (b_ih[(4 + k) * H:(5 + k) * H]
                                         + b_sh[k * H:(k + 1) * H])

    dims = dict(hp=hp, kin_p=kin_p, kp=kp, n_out=n_out)
    return jnp.asarray(w_all, matmul_dtype), jnp.asarray(b_all, jnp.float32), dims


# ----------------------------------------------------------------------------
# Fused Pallas kernel: all layers of the stacked Share_lstm_cell in one call
# ----------------------------------------------------------------------------
def stacked_share_lstm_kernel(
    x_ref,       # (bt, kin_p)              layer-0 input (zero padded)
    h0_ref,      # (bt, hp)                 h_0[layer]
    c0_ref,      # (bt, hp)                 c_0[layer]
    s0_ref,      # (bt, hp)                 s_0[idx][layer]
    mask_ref,    # (bt, 1)
    w_ref,       # (kp, n_out)              packed weights, bf16
    b_ref,       # (1, n_out)               packed bias, f32
    h1_ref,      # (bt, hp)                 outputs
    c1_ref,      # (bt, hp)
    s1_ref,      # (bt, share*hp)
    xcat_ref,    # VMEM scratch (bt, kp)    packed [inp | h | s], f32
    *,
    hp: int,
    kin_p: int,
    share: int,
    bt: int,
    compute_dtype,
):
    layer = pl.program_id(1)

    # Layer 0: load the external input into the packed-input slot.
    @pl.when(layer == 0)
    def _():
        xcat_ref[...] = jnp.zeros_like(xcat_ref)
        xcat_ref[:, :kin_p] = x_ref[...]

    # Current layer's recurrent inputs (lane-aligned segment writes).
    xcat_ref[:, kin_p:kin_p + hp] = h0_ref[...]
    xcat_ref[:, kin_p + hp:] = s0_ref[...]

    # One fused, block-structured MXU matmul (bf16 operands, f32 accumulate).
    z = jnp.dot(xcat_ref[...].astype(compute_dtype), w_ref[...],
                preferred_element_type=jnp.float32) + b_ref[...]

    # All slices below are 128-lane aligned (hp is a multiple of 128).
    i_g = jax.nn.sigmoid(z[:, 0 * hp:1 * hp])
    f_g = jax.nn.sigmoid(z[:, 1 * hp:2 * hp])
    o_g = jax.nn.sigmoid(z[:, 2 * hp:3 * hp])
    c_hat = z[:, 3 * hp:4 * hp]
    b_g = jax.nn.sigmoid(z[:, 4 * hp:])              # (bt, share*hp)

    mask = jnp.broadcast_to(mask_ref[...], (bt, hp))  # hoisted once, f32

    c_t = (f_g * c0_ref[...] + i_g * jnp.tanh(c_hat)) * mask
    t_c = jnp.tanh(c_t) * mask
    h_t = o_g * t_c

    h1_ref[...] = h_t
    c1_ref[...] = c_t
    # single lane-dense store for all `share` outputs
    s1_ref[...] = b_g * jnp.concatenate([t_c] * share, axis=-1)

    # Feed h into the next layer's input slot.
    @pl.when(layer + 1 < pl.num_programs(1))
    def _():
        xcat_ref[:, :hp] = h_t


# ----------------------------------------------------------------------------
# Wrapper: StackedLSTMCell.forward
# ----------------------------------------------------------------------------
def stacked_lstm_cell_forward(packed, x, h_0, c_0, s_0, mask, idx,
                              *, d_hid, share, n_layers,
                              compute_dtype=jnp.bfloat16):
    w_all, b_all, dims = packed
    hp, kin_p, kp, n_out = dims["hp"], dims["kin_p"], dims["kp"], dims["n_out"]
    B = x.shape[0]
    H = d_hid

    # Dropout(input) in eval mode == identity.
    # Zero-pad activations/state to lane-aligned widths (no-op if aligned).
    x_p = jnp.pad(x.astype(jnp.float32), ((0, 0), (0, kin_p - x.shape[1])))
    pad_state = lambda a: jnp.pad(a.astype(jnp.float32),
                                  ((0, 0), (0, 0), (0, hp - H)))
    h0_p = pad_state(h_0)
    c0_p = pad_state(c_0)
    s0_p = pad_state(s_0[idx])                 # idx is a static python int
    mask2 = mask.reshape(B, 1).astype(jnp.float32)

    bt = _pick_batch_tile(B)
    grid = (B // bt, n_layers)

    # VMEM budget: double-buffered blocks + scratch (+2x headroom), >= default.
    blk = (kp * n_out * jnp.dtype(compute_dtype).itemsize + n_out * 4
           + bt * (kin_p + 3 * hp + 1) * 4
           + bt * (2 + share) * hp * 4)
    vmem_limit = int(min(max(2 * (2 * blk + bt * kp * 4), 32 * 2**20),
                         100 * 2**20))

    kernel = functools.partial(stacked_share_lstm_kernel, hp=hp, kin_p=kin_p,
                               share=share, bt=bt, compute_dtype=compute_dtype)

    h1_p, c1_p, s1_p = pl.pallas_call(
        kernel,
        out_shape=(
            jax.ShapeDtypeStruct((n_layers, B, hp), jnp.float32),
            jax.ShapeDtypeStruct((n_layers, B, hp), jnp.float32),
            jax.ShapeDtypeStruct((n_layers, B, share * hp), jnp.float32),
        ),
        grid_spec=pltpu.PrefetchScalarGridSpec(
            num_scalar_prefetch=0,
            grid=grid,
            in_specs=[
                pl.BlockSpec((bt, kin_p), lambda b, l: (b, 0)),             # x
                pl.BlockSpec((None, bt, hp), lambda b, l: (l, b, 0)),       # h_0
                pl.BlockSpec((None, bt, hp), lambda b, l: (l, b, 0)),       # c_0
                pl.BlockSpec((None, bt, hp), lambda b, l: (l, b, 0)),       # s_0[idx]
                pl.BlockSpec((bt, 1), lambda b, l: (b, 0)),                 # mask
                pl.BlockSpec((None, kp, n_out), lambda b, l: (l, 0, 0)),    # W packed
                pl.BlockSpec((None, 1, n_out), lambda b, l: (l, 0, 0)),     # bias packed
            ],
            out_specs=(
                pl.BlockSpec((None, bt, hp), lambda b, l: (l, b, 0)),
                pl.BlockSpec((None, bt, hp), lambda b, l: (l, b, 0)),
                pl.BlockSpec((None, bt, share * hp), lambda b, l: (l, b, 0)),
            ),
            scratch_shapes=[pltpu.VMEM((bt, kp), jnp.float32)],
        ),
        compiler_params=pltpu.CompilerParams(
            dimension_semantics=("parallel", "arbitrary"),
            vmem_limit_bytes=vmem_limit,
        ),
    )(x_p, h0_p, c0_p, s0_p, mask2, w_all, b_all)

    h_1 = h1_p[:, :, :H]
    c_1 = c1_p[:, :, :H]
    s_list = [s1_p[:, :, k * hp:k * hp + H] for k in range(share)]
    out = h_1[n_layers - 1]
    return out, h_1, c_1, s_list


# ----------------------------------------------------------------------------
# Pure-JAX reference (mirrors the PyTorch code) for correctness checking
# ----------------------------------------------------------------------------
def _ref_cell(x, h, c, s_sel, mask, p, d_hid, share):
    mask = mask.reshape(-1, 1)
    tmp = x @ p["w_ih"].T + p["b_ih"]
    tmp2 = h @ p["w_hh"].T + p["b_hh"]
    tmp3 = s_sel @ p["w_sh"].T + p["b_sh"]
    tmp_in, tmp_s = tmp[:, :4 * d_hid], tmp[:, 4 * d_hid:]
    pre = tmp_in + tmp2
    ifob, c_hat = pre[:, :3 * d_hid], pre[:, 3 * d_hid:]
    g = jax.nn.sigmoid(ifob)
    i_g, f_g, o_g = g[:, :d_hid], g[:, d_hid:2 * d_hid], g[:, 2 * d_hid:]
    b_gates = jax.nn.sigmoid(tmp_s + tmp3)
    c_t = (f_g * c + i_g * jnp.tanh(c_hat)) * mask
    h_out = o_g * jnp.tanh(c_t) * mask
    s_out = [b_gates[:, k * d_hid:(k + 1) * d_hid] * jnp.tanh(c_t) * mask
             for k in range(share)]
    return h_out, c_t, s_out


def _ref_stacked(layer_params, x, h_0, c_0, s_0, mask, idx, d_hid, share, n_layers):
    inp = x
    h_1, c_1, s_1 = [], [], []
    for i in range(n_layers):
        s_0_i = [s[i] for s in s_0]
        h_i, c_i, s_i = _ref_cell(inp, h_0[i], c_0[i], s_0_i[idx], mask,
                                  layer_params[i], d_hid, share)
        inp = h_i
        h_1.append(h_i); c_1.append(c_i); s_1 += s_i
    return (inp, jnp.stack(h_1), jnp.stack(c_1),
            [jnp.stack(s_1[k::share]) for k in range(share)])


# ----------------------------------------------------------------------------
# Deterministic parameter init (matches reset_parameters: uniform(-stdv, stdv))
# ----------------------------------------------------------------------------
def init_cell_params(key, d_in, d_hid, share):
    stdv = 1.0 / np.sqrt(d_hid)
    num_gate = 4 + share
    ks = jax.random.split(key, 6)
    u = lambda k, shape: jax.random.uniform(k, shape, jnp.float32, -stdv, stdv)
    return {
        "w_ih": u(ks[0], (num_gate * d_hid, d_in)),
        "w_hh": u(ks[1], (4 * d_hid, d_hid)),
        "w_sh": u(ks[2], (share * d_hid, d_hid)),
        "b_ih": u(ks[3], (num_gate * d_hid,)),
        "b_hh": u(ks[4], (4 * d_hid,)),
        "b_sh": u(ks[5], (share * d_hid,)),
    }


if __name__ == "__main__":
    B, D_IN, D_HID = 8, 16, 32
    N_LAYERS, SHARE, IDX = 2, 2, 0

    key = jax.random.PRNGKey(0)
    k_params0, k_params1, kx, kh, kc, ks0, ks1, km = jax.random.split(key, 8)

    layer_params = [
        init_cell_params(k_params0, D_IN, D_HID, SHARE),
        init_cell_params(k_params1, D_HID, D_HID, SHARE),
    ]
    packed = pack_stacked_params(layer_params, D_IN, D_HID, SHARE,
                                 matmul_dtype=jnp.bfloat16)

    x = jax.random.normal(kx, (B, D_IN), jnp.float32)
    h_0 = jax.random.normal(kh, (N_LAYERS, B, D_HID), jnp.float32)
    c_0 = jax.random.normal(kc, (N_LAYERS, B, D_HID), jnp.float32)
    s_0 = [jax.random.normal(ks0, (N_LAYERS, B, D_HID), jnp.float32),
           jax.random.normal(ks1, (N_LAYERS, B, D_HID), jnp.float32)]
    mask = (jax.random.uniform(km, (B,)) > 0.25).astype(jnp.float32)

    out, h_1, c_1, s_list = stacked_lstm_cell_forward(
        packed, x, h_0, c_0, s_0, mask, IDX,
        d_hid=D_HID, share=SHARE, n_layers=N_LAYERS)
    jax.block_until_ready((out, h_1, c_1, s_list))

    # correctness check vs. pure-JAX f32 reference of the PyTorch math
    # (kernel uses bf16 MXU operands -> relaxed tolerance)
    r_out, r_h1, r_c1, r_s = _ref_stacked(
        layer_params, x, h_0, c_0, s_0, mask, IDX, D_HID, SHARE, N_LAYERS)
    tol = dict(rtol=6e-2, atol=6e-2)
    np.testing.assert_allclose(np.asarray(out), np.asarray(r_out), **tol)
    np.testing.assert_allclose(np.asarray(h_1), np.asarray(r_h1), **tol)
    np.testing.assert_allclose(np.asarray(c_1), np.asarray(r_c1), **tol)
    for a, b in zip(s_list, r_s):
        np.testing.assert_allclose(np.asarray(a), np.asarray(b), **tol)

    print("KERNEL_OK")
</pallas_src>

<mosaic_0001>
module attributes {stable_mosaic.version = 11 : i64} {
  func.func @stacked_share_lstm_kernel(%arg0: i32, %arg1: i32, %arg2: memref<8x128xf32, #tpu.memory_space<vmem>>, %arg3: memref<1x8x128xf32, #tpu.memory_space<vmem>>, %arg4: memref<1x8x128xf32, #tpu.memory_space<vmem>>, %arg5: memref<1x8x128xf32, #tpu.memory_space<vmem>>, %arg6: memref<8x1xf32, #tpu.memory_space<vmem>>, %arg7: memref<1x384x768xbf16, #tpu.memory_space<vmem>>, %arg8: memref<1x1x768xf32, #tpu.memory_space<vmem>>, %arg9: memref<1x8x128xf32, #tpu.memory_space<vmem>>, %arg10: memref<1x8x128xf32, #tpu.memory_space<vmem>>, %arg11: memref<1x8x256xf32, #tpu.memory_space<vmem>>, %arg12: memref<8x384xf32, #tpu.memory_space<vmem>>) attributes {dimension_semantics = [#tpu.dimension_semantics<parallel>, #tpu.dimension_semantics<arbitrary>], iteration_bounds = array<i64: 1, 2>, scalar_prefetch = 0 : i64, scratch_operands = 1 : i64, tpu.core_type = #tpu.core_type<tc>, window_params = [{transform_indices = @transform_0, window_bounds = array<i64: 8, 128>}, {transform_indices = @transform_1, window_bounds = array<i64: 1, 8, 128>}, {transform_indices = @transform_2, window_bounds = array<i64: 1, 8, 128>}, {transform_indices = @transform_3, window_bounds = array<i64: 1, 8, 128>}, {transform_indices = @transform_4, window_bounds = array<i64: 8, 1>}, {transform_indices = @transform_5, window_bounds = array<i64: 1, 384, 768>}, {transform_indices = @transform_6, window_bounds = array<i64: 1, 1, 768>}, {transform_indices = @transform_7, window_bounds = array<i64: 1, 8, 128>}, {transform_indices = @transform_8, window_bounds = array<i64: 1, 8, 128>}, {transform_indices = @transform_9, window_bounds = array<i64: 1, 8, 256>}]} {
    %c0_i32 = arith.constant 0 : i32
    %0 = arith.cmpi eq, %arg1, %c0_i32 : i32
    %1 = arith.extui %0 : i1 to i32
    %c0_i32_0 = arith.constant 0 : i32
    %2 = arith.cmpi ne, %1, %c0_i32_0 : i32
    scf.if %2 {
      %cst_35 = arith.constant 0.000000e+00 : f32
      %71 = vector.broadcast %cst_35 : f32 to vector<8x384xf32>
      %c0_36 = arith.constant 0 : index
      %c0_37 = arith.constant 0 : index
      %72 = vector.load %arg12[%c0_36, %c0_37] : memref<8x384xf32, #tpu.memory_space<vmem>>, vector<8x384xf32>
      tpu.vector_store %arg12[%c0_36, %c0_37], %71 {strides = array<i32>} : memref<8x384xf32, #tpu.memory_space<vmem>>, vector<8x384xf32>,
      %c0_38 = arith.constant 0 : index
      %c0_39 = arith.constant 0 : index
      %73 = vector.load %arg2[%c0_38, %c0_39] : memref<8x128xf32, #tpu.memory_space<vmem>>, vector<8x128xf32>
      %c0_40 = arith.constant 0 : index
      %c0_41 = arith.constant 0 : index
      %74 = vector.load %arg12[%c0_40, %c0_41] : memref<8x384xf32, #tpu.memory_space<vmem>>, vector<8x128xf32>
      tpu.vector_store %arg12[%c0_40, %c0_41], %73 {strides = array<i32>} : memref<8x384xf32, #tpu.memory_space<vmem>>, vector<8x128xf32>,
    } else {
    }
    %c0 = arith.constant 0 : index
    %c0_1 = arith.constant 0 : index
    %c0_2 = arith.constant 0 : index
    %3 = vector.load %arg3[%c0, %c0_1, %c0_2] : memref<1x8x128xf32, #tpu.memory_space<vmem>>, vector<1x8x128xf32>
    %4 = vector.shape_cast %3 : vector<1x8x128xf32> to vector<8x128xf32>
    %c0_3 = arith.constant 0 : index
    %c128 = arith.constant 128 : index
    %5 = vector.load %arg12[%c0_3, %c128] : memref<8x384xf32, #tpu.memory_space<vmem>>, vector<8x128xf32>
    tpu.vector_store %arg12[%c0_3, %c128], %4 {strides = array<i32>} : memref<8x384xf32, #tpu.memory_space<vmem>>, vector<8x128xf32>,
    %c0_4 = arith.constant 0 : index
    %c0_5 = arith.constant 0 : index
    %c0_6 = arith.constant 0 : index
    %6 = vector.load %arg5[%c0_4, %c0_5, %c0_6] : memref<1x8x128xf32, #tpu.memory_space<vmem>>, vector<1x8x128xf32>
    %7 = vector.shape_cast %6 : vector<1x8x128xf32> to vector<8x128xf32>
    %c0_7 = arith.constant 0 : index
    %c256 = arith.constant 256 : index
    %8 = vector.load %arg12[%c0_7, %c256] : memref<8x384xf32, #tpu.memory_space<vmem>>, vector<8x128xf32>
    tpu.vector_store %arg12[%c0_7, %c256], %7 {strides = array<i32>} : memref<8x384xf32, #tpu.memory_space<vmem>>, vector<8x128xf32>,
    %c0_8 = arith.constant 0 : index
    %c0_9 = arith.constant 0 : index
    %9 = vector.load %arg12[%c0_8, %c0_9] : memref<8x384xf32, #tpu.memory_space<vmem>>, vector<8x384xf32>
    %10 = arith.truncf %9 : vector<8x384xf32> to vector<8x384xbf16>
    %c0_10 = arith.constant 0 : index
    %c0_11 = arith.constant 0 : index
    %c0_12 = arith.constant 0 : index
    %11 = vector.load %arg7[%c0_10, %c0_11, %c0_12] : memref<1x384x768xbf16, #tpu.memory_space<vmem>>, vector<1x384x768xbf16>
    %12 = vector.shape_cast %11 : vector<1x384x768xbf16> to vector<384x768xbf16>
    %cst = arith.constant dense<0.000000e+00> : vector<8x768xf32>
    %13 = tpu.matmul %10, %12, %cst {dimension_numbers = #tpu.dot_dimension_numbers<[1], [0], [0], [1], [0, 0, 1, 1], [], []>} : vector<8x384xbf16>, vector<384x768xbf16>, vector<8x768xf32> -> vector<8x768xf32>
    %c0_13 = arith.constant 0 : index
    %c0_14 = arith.constant 0 : index
    %c0_15 = arith.constant 0 : index
    %14 = vector.load %arg8[%c0_13, %c0_14, %c0_15] : memref<1x1x768xf32, #tpu.memory_space<vmem>>, vector<1x1x768xf32>
    %15 = vector.shape_cast %14 : vector<1x1x768xf32> to vector<1x768xf32>
    %16 = vector.broadcast %15 : vector<1x768xf32> to vector<8x768xf32>
    %17 = arith.addf %13, %16 : vector<8x768xf32>
    %18 = vector.extract_strided_slice %17 {offsets = [0, 0], sizes = [8, 128], strides = [1, 1]} : vector<8x768xf32> to vector<8x128xf32>
    %19 = arith.negf %18 : vector<8x128xf32>
    %20 = math.exp %19 : vector<8x128xf32>
    %cst_16 = arith.constant 1.000000e+00 : f32
    %21 = vector.broadcast %cst_16 : f32 to vector<8x128xf32>
    %22 = arith.addf %21, %20 : vector<8x128xf32>
    %23 = arith.divf %21, %22 : vector<8x128xf32>
    %24 = vector.extract_strided_slice %17 {offsets = [0, 128], sizes = [8, 128], strides = [1, 1]} : vector<8x768xf32> to vector<8x128xf32>
    %25 = arith.negf %24 : vector<8x128xf32>
    %26 = math.exp %25 : vector<8x128xf32>
    %cst_17 = arith.constant 1.000000e+00 : f32
    %27 = vector.broadcast %cst_17 : f32 to vector<8x128xf32>
    %28 = arith.addf %27, %26 : vector<8x128xf32>
    %29 = arith.divf %27, %28 : vector<8x128xf32>
    %30 = vector.extract_strided_slice %17 {offsets = [0, 256], sizes = [8, 128], strides = [1, 1]} : vector<8x768xf32> to vector<8x128xf32>
    %31 = arith.negf %30 : vector<8x128xf32>
    %32 = math.exp %31 : vector<8x128xf32>
    %cst_18 = arith.constant 1.000000e+00 : f32
    %33 = vector.broadcast %cst_18 : f32 to vector<8x128xf32>
    %34 = arith.addf %33, %32 : vector<8x128xf32>
    %35 = arith.divf %33, %34 : vector<8x128xf32>
    %36 = vector.extract_strided_slice %17 {offsets = [0, 384], sizes = [8, 128], strides = [1, 1]} : vector<8x768xf32> to vector<8x128xf32>
    %37 = vector.extract_strided_slice %17 {offsets = [0, 512], sizes = [8, 256], strides = [1, 1]} : vector<8x768xf32> to vector<8x256xf32>
    %38 = arith.negf %37 : vector<8x256xf32>
    %39 = math.exp %38 : vector<8x256xf32>
    %cst_19 = arith.constant 1.000000e+00 : f32
    %40 = vector.broadcast %cst_19 : f32 to vector<8x256xf32>
    %41 = arith.addf %40, %39 : vector<8x256xf32>
    %42 = arith.divf %40, %41 : vector<8x256xf32>
    %c0_20 = arith.constant 0 : index
    %c0_21 = arith.constant 0 : index
    %43 = vector.load %arg6[%c0_20, %c0_21] : memref<8x1xf32, #tpu.memory_space<vmem>>, vector<8x1xf32>
    %44 = vector.shape_cast %43 : vector<8x1xf32> to vector<8x1xf32>
    %45 = vector.broadcast %44 : vector<8x1xf32> to vector<8x128xf32>
    %c0_22 = arith.constant 0 : index
    %c0_23 = arith.constant 0 : index
    %c0_24 = arith.constant 0 : index
    %46 = vector.load %arg4[%c0_22, %c0_23, %c0_24] : memref<1x8x128xf32, #tpu.memory_space<vmem>>, vector<1x8x128xf32>
    %47 = vector.shape_cast %46 : vector<1x8x128xf32> to vector<8x128xf32>
    %48 = arith.mulf %29, %47 : vector<8x128xf32>
    %49 = math.tanh %36 : vector<8x128xf32>
    %50 = arith.mulf %23, %49 : vector<8x128xf32>
    %51 = arith.addf %48, %50 : vector<8x128xf32>
    %52 = arith.mulf %51, %45 : vector<8x128xf32>
    %53 = math.tanh %52 : vector<8x128xf32>
    %54 = arith.mulf %53, %45 : vector<8x128xf32>
    %55 = arith.mulf %35, %54 : vector<8x128xf32>
    %c0_25 = arith.constant 0 : index
    %c0_26 = arith.constant 0 : index
    %c0_27 = arith.constant 0 : index
    %56 = vector.load %arg9[%c0_25, %c0_26, %c0_27] : memref<1x8x128xf32, #tpu.memory_space<vmem>>, vector<1x8x128xf32>
    %57 = vector.shape_cast %56 : vector<1x8x128xf32> to vector<8x128xf32>
    %58 = vector.shape_cast %55 : vector<8x128xf32> to vector<1x8x128xf32>
    tpu.vector_store %arg9[%c0_25, %c0_26, %c0_27], %58 {strides = array<i32>} : memref<1x8x128xf32, #tpu.memory_space<vmem>>, vector<1x8x128xf32>,
    %c0_28 = arith.constant 0 : index
    %c0_29 = arith.constant 0 : index
    %c0_30 = arith.constant 0 : index
    %59 = vector.load %arg10[%c0_28, %c0_29, %c0_30] : memref<1x8x128xf32, #tpu.memory_space<vmem>>, vector<1x8x128xf32>
    %60 = vector.shape_cast %59 : vector<1x8x128xf32> to vector<8x128xf32>
    %61 = vector.shape_cast %52 : vector<8x128xf32> to vector<1x8x128xf32>
    tpu.vector_store %arg10[%c0_28, %c0_29, %c0_30], %61 {strides = array<i32>} : memref<1x8x128xf32, #tpu.memory_space<vmem>>, vector<1x8x128xf32>,
    %62 = tpu.concatenate %54, %54 in 1 : vector<8x128xf32>, vector<8x128xf32> -> vector<8x256xf32>
    %63 = arith.mulf %42, %62 : vector<8x256xf32>
    %c0_31 = arith.constant 0 : index
    %c0_32 = arith.constant 0 : index
    %c0_33 = arith.constant 0 : index
    %64 = vector.load %arg11[%c0_31, %c0_32, %c0_33] : memref<1x8x256xf32, #tpu.memory_space<vmem>>, vector<1x8x256xf32>
    %65 = vector.shape_cast %64 : vector<1x8x256xf32> to vector<8x256xf32>
    %66 = vector.shape_cast %63 : vector<8x256xf32> to vector<1x8x256xf32>
    tpu.vector_store %arg11[%c0_31, %c0_32, %c0_33], %66 {strides = array<i32>} : memref<1x8x256xf32, #tpu.memory_space<vmem>>, vector<1x8x256xf32>,
    %c1_i32 = arith.constant 1 : i32
    %67 = arith.addi %arg1, %c1_i32 : i32
    %c2_i32 = arith.constant 2 : i32
    %68 = arith.cmpi slt, %67, %c2_i32 : i32
    %69 = arith.extui %68 : i1 to i32
    %c0_i32_34 = arith.constant 0 : i32
    %70 = arith.cmpi ne, %69, %c0_i32_34 : i32
    scf.if %70 {
      %c0_35 = arith.constant 0 : index
      %c0_36 = arith.constant 0 : index
      %71 = vector.load %arg12[%c0_35, %c0_36] : memref<8x384xf32, #tpu.memory_space<vmem>>, vector<8x128xf32>
      tpu.vector_store %arg12[%c0_35, %c0_36], %55 {strides = array<i32>} : memref<8x384xf32, #tpu.memory_space<vmem>>, vector<8x128xf32>,
    } else {
    }
    return
  }
  func.func @transform_0(%arg0: i32, %arg1: i32) -> (i32, i32) {
    %c0_i32 = arith.constant 0 : i32
    %c0_i32_0 = arith.constant 0 : i32
    return %arg0, %c0_i32 : i32, i32
  }
  func.func @transform_1(%arg0: i32, %arg1: i32) -> (i32, i32, i32) {
    %c0_i32 = arith.constant 0 : i32
    %c0_i32_0 = arith.constant 0 : i32
    return %arg1, %arg0, %c0_i32 : i32, i32, i32
  }
  func.func @transform_2(%arg0: i32, %arg1: i32) -> (i32, i32, i32) {
    %c0_i32 = arith.constant 0 : i32
    %c0_i32_0 = arith.constant 0 : i32
    return %arg1, %arg0, %c0_i32 : i32, i32, i32
  }
  func.func @transform_3(%arg0: i32, %arg1: i32) -> (i32, i32, i32) {
    %c0_i32 = arith.constant 0 : i32
    %c0_i32_0 = arith.constant 0 : i32
    return %arg1, %arg0, %c0_i32 : i32, i32, i32
  }
  func.func @transform_4(%arg0: i32, %arg1: i32) -> (i32, i32) {
    %c0_i32 = arith.constant 0 : i32
    %c0_i32_0 = arith.constant 0 : i32
    return %arg0, %c0_i32 : i32, i32
  }
  func.func @transform_5(%arg0: i32, %arg1: i32) -> (i32, i32, i32) {
    %c0_i32 = arith.constant 0 : i32
    %c0_i32_0 = arith.constant 0 : i32
    %c0_i32_1 = arith.constant 0 : i32
    return %arg1, %c0_i32, %c0_i32_0 : i32, i32, i32
  }
  func.func @transform_6(%arg0: i32, %arg1: i32) -> (i32, i32, i32) {
    %c0_i32 = arith.constant 0 : i32
    %c0_i32_0 = arith.constant 0 : i32
    %c0_i32_1 = arith.constant 0 : i32
    return %arg1, %c0_i32, %c0_i32_0 : i32, i32, i32
  }
  func.func @transform_7(%arg0: i32, %arg1: i32) -> (i32, i32, i32) {
    %c0_i32 = arith.constant 0 : i32
    %c0_i32_0 = arith.constant 0 : i32
    return %arg1, %arg0, %c0_i32 : i32, i32, i32
  }
  func.func @transform_8(%arg0: i32, %arg1: i32) -> (i32, i32, i32) {
    %c0_i32 = arith.constant 0 : i32
    %c0_i32_0 = arith.constant 0 : i32
    return %arg1, %arg0, %c0_i32 : i32, i32, i32
  }
  func.func @transform_9(%arg0: i32, %arg1: i32) -> (i32, i32, i32) {
    %c0_i32 = arith.constant 0 : i32
    %c0_i32_0 = arith.constant 0 : i32
    return %arg1, %arg0, %c0_i32 : i32, i32, i32
  }
}

</mosaic_0001>

<llo_original>
// kernel: tpu_custom_call.1
$region0: #{tpu_custom_call.1}
  #allocation0 [shape = 'u32[]', space=smem, size = 0x4, offset = 0x4, fixed_abs, tag = 'smem constant byte address 0x4 - core index']
  #allocation1 [shape = 'u32[144,128]{1,0:T(1,128)}', space=vmem, size = 0x12000, scoped, tag = 'internal scratch']
  #allocation2 [shape = 'f32[8,384]{1,0:T(8,128)}', space=vmem, size = 0x3000, scoped, tag = 'scratch operand']
  %s0 = inlined_call_operand.hbm [shape: f32[8,128], index: 0, kind: input, shape index: {}]
  %s1 = inlined_call_operand.hbm [shape: f32[2,8,128], index: 1, kind: input, shape index: {}]
  %s2 = inlined_call_operand.hbm [shape: f32[2,8,128], index: 2, kind: input, shape index: {}]
  %s3 = inlined_call_operand.hbm [shape: f32[2,8,128], index: 3, kind: input, shape index: {}]
  %s4 = inlined_call_operand.vmem [shape: f32[8,1], index: 4, kind: input, shape index: {}]
  %s5 = inlined_call_operand.hbm [shape: bf16[2,384,768], index: 5, kind: input, shape index: {}]
  %s6 = inlined_call_operand.hbm [shape: f32[2,1,768], index: 6, kind: input, shape index: {}]
  %s7 = inlined_call_operand.hbm [shape: f32[2,8,128], index: 7, kind: output, shape index: {0}]
  %s8 = inlined_call_operand.hbm [shape: f32[2,8,128], index: 8, kind: output, shape index: {1}]
  %s9 = inlined_call_operand.hbm [shape: f32[2,8,256], index: 9, kind: output, shape index: {2}]
  %10 = xla_tuple %s7, %s8, %s9
  %s11 = sld [smem:[#allocation0]]
  $region109: #{tpu_custom_call.1} parent=0
    _
  %s13 = ssub.s32 1, %s11
  %s14 = scalar_select 0, %s13, %s11
  $region1: #{tpu_custom_call.1} parent=0
    #allocation3 [shape = 'u8[4096]{0}', space=vmem, size = 0x1000, scoped, tag = 'input window, operand 0, single buffered']
    #allocation4 [shape = 's32[2]{0}', space=sflag, size = 0x8, scoped, tag = 'scoped memory for tpu_custom_call.1']
    #allocation5 [shape = 's32[2]{0}', space=sflag, size = 0x8, scoped, tag = 'scoped memory for tpu_custom_call.1']
    #allocation6 [shape = 'u8[8192]{0}', space=vmem, size = 0x2000, scoped, tag = 'input window, operand 1']
    #allocation7 [shape = 's32[2]{0}', space=sflag, size = 0x8, scoped, tag = 'scoped memory for tpu_custom_call.1']
    #allocation8 [shape = 'u8[8192]{0}', space=vmem, size = 0x2000, scoped, tag = 'input window, operand 2']
    #allocation9 [shape = 'u8[8192]{0}', space=vmem, size = 0x2000, scoped, tag = 'input window, operand 3']
    #allocation10 [shape = 's32[2]{0}', space=sflag, size = 0x8, scoped, tag = 'scoped memory for tpu_custom_call.1']
    #allocation11 [shape = 'u8[1179648]{0}', space=vmem, size = 0x120000, scoped, tag = 'input window, operand 5']
    #allocation12 [shape = 'u8[6144]{0}', space=vmem, size = 0x1800, scoped, tag = 'input window, operand 6']
    #allocation13 [shape = 's32[2]{0}', space=sflag, size = 0x8, scoped, tag = 'scoped memory for tpu_custom_call.1']
    #allocation14 [shape = 'u8[8192]{0}', space=vmem, size = 0x2000, scoped, tag = 'output window, operand 0']
    #allocation15 [shape = 'u8[8192]{0}', space=vmem, size = 0x2000, scoped, tag = 'output window, operand 1']
    #allocation16 [shape = 's32[2]{0}', space=sflag, size = 0x8, scoped, tag = 'scoped memory for tpu_custom_call.1']
    #allocation17 [shape = 'u8[16384]{0}', space=vmem, size = 0x4000, scoped, tag = 'output window, operand 2']
    %15 = vsyncpa [#allocation4], 0
    %16 = vsyncpa [#allocation7], 0
    %s17 = scalar_lea.sflag [#allocation7], 1
    %18 = vsyncpa %s17, 0
    %19 = vsyncpa [#allocation10], 0
    %s20 = scalar_lea.sflag [#allocation10], 1
    %21 = vsyncpa %s20, 0
    %22 = vsyncpa [#allocation13], 0
    %s23 = scalar_lea.sflag [#allocation13], 1
    %24 = vsyncpa %s23, 0
    %25 = vsyncpa [#allocation5], 0
    %s26 = scalar_lea.sflag [#allocation5], 1
    %27 = vsyncpa %s26, 0
    %28 = vsyncpa [#allocation16], 0
    %s29 = scalar_lea.sflag [#allocation16], 1
    %30 = vsyncpa %s29, 0
    loop: start=0, step=1, limit=4
    $region2: #{tpu_custom_call.1} parent=1 // loop_pre_header
      _
    $region3: #{tpu_custom_call.1} parent=1 // loop_header
      %s32 = sphi 0, %s36
      %p33 = scmp.ge.s32.totalorder %s32, 4
      %s39 = sphi 0, %s51
      %s40 = sphi 0, %s47
      %s41 = sphi 0, %s39
      %s42 = sphi 0, %s40
      %s43 = sphi 0, %s41
      %s44 = sphi 0, %s42
      %s54 = sphi 0, %s56
      %s57 = sphi 0, %s54
      %s58 = sphi 0, %s57
      %s74 = sphi 0, %s58
      %s82 = sphi 0, %s84
      %s85 = sphi 0, %s82
      %s86 = sphi 0, %s85
      %s102 = sphi 0, %s86
      %s110 = sphi 0, %s112
      %s113 = sphi 0, %s110
      %s114 = sphi 0, %s113
      %s130 = sphi 0, %s114
      %s138 = sphi 0, %s140
      %s141 = sphi 0, %s138
      %s142 = sphi 0, %s141
      %s158 = sphi 0, %s142
      %s164 = sphi 0, %s166
      %s167 = sphi 0, %s164
      %s168 = sphi 0, %s167
      %s184 = sphi 0, %s168
      %s190 = sphi 0, %s192
      %s193 = sphi 0, %s190
      %s194 = sphi 0, %s193
      %s210 = sphi 0, %s194
      %s216 = sphi 0, %s218
      %s219 = sphi 0, %s216
      %s220 = sphi 0, %s219
      %s236 = sphi 0, %s220
      %s244 = sphi 0, %s246
      %s247 = sphi 0, %s244
      %s248 = sphi 0, %s247
      %s264 = sphi 0, %s248
      %s272 = sphi 0, %s274
      %s275 = sphi 0, %s272
      %s276 = sphi 0, %s275
      %s292 = sphi 0, %s276
      %s300 = sphi 0, %s302
      %s303 = sphi 0, %s300
      %s304 = sphi 0, %s303
      %s320 = sphi 0, %s304
    $region4: #{tpu_custom_call.1} parent=1 // loop_header_branch
      %35 = sbr.rel (%p33) target = $region8
    $region5: #{tpu_custom_call.1} parent=1 // loop_body
      %s37 = ssub.s32 %s32, 1
      %s38 = ssub.s32 %s32, 2
      %s45 = sadd.s32 1, %s40
      %p46 = scmp.ge.s32.totalorder %s45, 2
      %s47 = scalar_select %p46, 0, %s45
      %s48 = sadd.s32 1, %s39
      %s49 = scalar_select %p46, %s48, %s39
      %p50 = scmp.ge.s32.totalorder %s49, 1
      %s51 = scalar_select %p50, 0, %s49
      %s52 = ssub.s32 %s39, %s51
      %p53 = scmp.eq.s32.totalorder %s52, 0
      %s55 = sadd.s32 %s54, 1
      %s56 = scalar_select %p53, %s54, %s55
      %p59 = pneg %p53
      %p60 = scmp.eq.s32.totalorder %s32, 1
      %p61 = por %p59, %p60
      %p62 = scmp.ne.s32.totalorder %s54, %s57
      %p63 = scmp.eq.s32.totalorder %s32, 0
      %p64 = por %p62, %p63
      %p65 = scmp.ne.s32.totalorder %s54, %s57
      %p66 = scmp.eq.s32.totalorder %s37, 1
      %p67 = por %p65, %p66
      %p68 = scmp.ne.s32.totalorder %s57, %s58
      %p69 = scmp.eq.s32.totalorder %s37, 0
      %p70 = por %p68, %p69
      %p71 = scmp.ne.s32.totalorder %s57, %s58
      %p72 = scmp.eq.s32.totalorder %s38, 1
      %p73 = por %p71, %p72
      %p75 = scmp.ne.s32.totalorder %s58, %s74
      %p76 = scmp.eq.s32.totalorder %s38, 0
      %p77 = por %p75, %p76
      %s78 = ssub.s32 %s40, %s47
      %s79 = ssub.s32 %s39, %s51
      %s80 = sor.u32 %s78, %s79
      %p81 = scmp.eq.s32.totalorder %s80, 0
      %s83 = sadd.s32 %s82, 1
      %s84 = scalar_select %p81, %s82, %s83
      %p87 = pneg %p81
      %p88 = scmp.eq.s32.totalorder %s32, 1
      %p89 = por %p87, %p88
      %p90 = scmp.ne.s32.totalorder %s82, %s85
      %p91 = scmp.eq.s32.totalorder %s32, 0
      %p92 = por %p90, %p91
      %p93 = scmp.ne.s32.totalorder %s82, %s85
      %p94 = scmp.eq.s32.totalorder %s37, 1
      %p95 = por %p93, %p94
      %p96 = scmp.ne.s32.totalorder %s85, %s86
      %p97 = scmp.eq.s32.totalorder %s37, 0
      %p98 = por %p96, %p97
      %p99 = scmp.ne.s32.totalorder %s85, %s86
      %p100 = scmp.eq.s32.totalorder %s38, 1
      %p101 = por %p99, %p100
      %p103 = scmp.ne.s32.totalorder %s86, %s102
      %p104 = scmp.eq.s32.totalorder %s38, 0
      %p105 = por %p103, %p104
      %s106 = ssub.s32 %s40, %s47
      %s107 = ssub.s32 %s39, %s51
      %s108 = sor.u32 %s106, %s107
      %p109 = scmp.eq.s32.totalorder %s108, 0
      %s111 = sadd.s32 %s110, 1
      %s112 = scalar_select %p109, %s110, %s111
      %p115 = pneg %p109
      %p116 = scmp.eq.s32.totalorder %s32, 1
      %p117 = por %p115, %p116
      %p118 = scmp.ne.s32.totalorder %s110, %s113
      %p119 = scmp.eq.s32.totalorder %s32, 0
      %p120 = por %p118, %p119
      %p121 = scmp.ne.s32.totalorder %s110, %s113
      %p122 = scmp.eq.s32.totalorder %s37, 1
      %p123 = por %p121, %p122
      %p124 = scmp.ne.s32.totalorder %s113, %s114
      %p125 = scmp.eq.s32.totalorder %s37, 0
      %p126 = por %p124, %p125
      %p127 = scmp.ne.s32.totalorder %s113, %s114
      %p128 = scmp.eq.s32.totalorder %s38, 1
      %p129 = por %p127, %p128
      %p131 = scmp.ne.s32.totalorder %s114, %s130
      %p132 = scmp.eq.s32.totalorder %s38, 0
      %p133 = por %p131, %p132
      %s134 = ssub.s32 %s40, %s47
      %s135 = ssub.s32 %s39, %s51
      %s136 = sor.u32 %s134, %s135
      %p137 = scmp.eq.s32.totalorder %s136, 0
      %s139 = sadd.s32 %s138, 1
      %s140 = scalar_select %p137, %s138, %s139
      %p143 = pneg %p137
      %p144 = scmp.eq.s32.totalorder %s32, 1
      %p145 = por %p143, %p144
      %p146 = scmp.ne.s32.totalorder %s138, %s141
      %p147 = scmp.eq.s32.totalorder %s32, 0
      %p148 = por %p146, %p147
      %p149 = scmp.ne.s32.totalorder %s138, %s141
      %p150 = scmp.eq.s32.totalorder %s37, 1
      %p151 = por %p149, %p150
      %p152 = scmp.ne.s32.totalorder %s141, %s142
      %p153 = scmp.eq.s32.totalorder %s37, 0
      %p154 = por %p152, %p153
      %p155 = scmp.ne.s32.totalorder %s141, %s142
      %p156 = scmp.eq.s32.totalorder %s38, 1
      %p157 = por %p155, %p156
      %p159 = scmp.ne.s32.totalorder %s142, %s158
      %p160 = scmp.eq.s32.totalorder %s38, 0
      %p161 = por %p159, %p160
      %s162 = ssub.s32 %s39, %s51
      %p163 = scmp.eq.s32.totalorder %s162, 0
      %s165 = sadd.s32 %s164, 1
      %s166 = scalar_select %p163, %s164, %s165
      %p169 = pneg %p163
      %p170 = scmp.eq.s32.totalorder %s32, 1
      %p171 = por %p169, %p170
      %p172 = scmp.ne.s32.totalorder %s164, %s167
      %p173 = scmp.eq.s32.totalorder %s32, 0
      %p174 = por %p172, %p173
      %p175 = scmp.ne.s32.totalorder %s164, %s167
      %p176 = scmp.eq.s32.totalorder %s37, 1
      %p177 = por %p175, %p176
      %p178 = scmp.ne.s32.totalorder %s167, %s168
      %p179 = scmp.eq.s32.totalorder %s37, 0
      %p180 = por %p178, %p179
      %p181 = scmp.ne.s32.totalorder %s167, %s168
      %p182 = scmp.eq.s32.totalorder %s38, 1
      %p183 = por %p181, %p182
      %p185 = scmp.ne.s32.totalorder %s168, %s184
      %p186 = scmp.eq.s32.totalorder %s38, 0
      %p187 = por %p185, %p186
      %s188 = ssub.s32 %s40, %s47
      %p189 = scmp.eq.s32.totalorder %s188, 0
      %s191 = sadd.s32 %s190, 1
      %s192 = scalar_select %p189, %s190, %s191
      %p195 = pneg %p189
      %p196 = scmp.eq.s32.totalorder %s32, 1
      %p197 = por %p195, %p196
      %p198 = scmp.ne.s32.totalorder %s190, %s193
      %p199 = scmp.eq.s32.totalorder %s32, 0
      %p200 = por %p198, %p199
      %p201 = scmp.ne.s32.totalorder %s190, %s193
      %p202 = scmp.eq.s32.totalorder %s37, 1
      %p203 = por %p201, %p202
      %p204 = scmp.ne.s32.totalorder %s193, %s194
      %p205 = scmp.eq.s32.totalorder %s37, 0
      %p206 = por %p204, %p205
      %p207 = scmp.ne.s32.totalorder %s193, %s194
      %p208 = scmp.eq.s32.totalorder %s38, 1
      %p209 = por %p207, %p208
      %p211 = scmp.ne.s32.totalorder %s194, %s210
      %p212 = scmp.eq.s32.totalorder %s38, 0
      %p213 = por %p211, %p212
      %s214 = ssub.s32 %s40, %s47
      %p215 = scmp.eq.s32.totalorder %s214, 0
      %s217 = sadd.s32 %s216, 1
      %s218 = scalar_select %p215, %s216, %s217
      %p221 = pneg %p215
      %p222 = scmp.eq.s32.totalorder %s32, 1
      %p223 = por %p221, %p222
      %p224 = scmp.ne.s32.totalorder %s216, %s219
      %p225 = scmp.eq.s32.totalorder %s32, 0
      %p226 = por %p224, %p225
      %p227 = scmp.ne.s32.totalorder %s216, %s219
      %p228 = scmp.eq.s32.totalorder %s37, 1
      %p229 = por %p227, %p228
      %p230 = scmp.ne.s32.totalorder %s219, %s220
      %p231 = scmp.eq.s32.totalorder %s37, 0
      %p232 = por %p230, %p231
      %p233 = scmp.ne.s32.totalorder %s219, %s220
      %p234 = scmp.eq.s32.totalorder %s38, 1
      %p235 = por %p233, %p234
      %p237 = scmp.ne.s32.totalorder %s220, %s236
      %p238 = scmp.eq.s32.totalorder %s38, 0
      %p239 = por %p237, %p238
      %s240 = ssub.s32 %s40, %s47
      %s241 = ssub.s32 %s39, %s51
      %s242 = sor.u32 %s240, %s241
      %p243 = scmp.eq.s32.totalorder %s242, 0
      %s245 = sadd.s32 %s244, 1
      %s246 = scalar_select %p243, %s244, %s245
      %p249 = pneg %p243
      %p250 = scmp.eq.s32.totalorder %s32, 1
      %p251 = por %p249, %p250
      %p252 = scmp.ne.s32.totalorder %s244, %s247
      %p253 = scmp.eq.s32.totalorder %s32, 0
      %p254 = por %p252, %p253
      %p255 = scmp.ne.s32.totalorder %s244, %s247
      %p256 = scmp.eq.s32.totalorder %s37, 1
      %p257 = por %p255, %p256
      %p258 = scmp.ne.s32.totalorder %s247, %s248
      %p259 = scmp.eq.s32.totalorder %s37, 0
      %p260 = por %p258, %p259
      %p261 = scmp.ne.s32.totalorder %s247, %s248
      %p262 = scmp.eq.s32.totalorder %s38, 1
      %p263 = por %p261, %p262
      %p265 = scmp.ne.s32.totalorder %s248, %s264
      %p266 = scmp.eq.s32.totalorder %s38, 0
      %p267 = por %p265, %p266
      %s268 = ssub.s32 %s40, %s47
      %s269 = ssub.s32 %s39, %s51
      %s270 = sor.u32 %s268, %s269
      %p271 = scmp.eq.s32.totalorder %s270, 0
      %s273 = sadd.s32 %s272, 1
      %s274 = scalar_select %p271, %s272, %s273
      %p277 = pneg %p271
      %p278 = scmp.eq.s32.totalorder %s32, 1
      %p279 = por %p277, %p278
      %p280 = scmp.ne.s32.totalorder %s272, %s275
      %p281 = scmp.eq.s32.totalorder %s32, 0
      %p282 = por %p280, %p281
      %p283 = scmp.ne.s32.totalorder %s272, %s275
      %p284 = scmp.eq.s32.totalorder %s37, 1
      %p285 = por %p283, %p284
      %p286 = scmp.ne.s32.totalorder %s275, %s276
      %p287 = scmp.eq.s32.totalorder %s37, 0
      %p288 = por %p286, %p287
      %p289 = scmp.ne.s32.totalorder %s275, %s276
      %p290 = scmp.eq.s32.totalorder %s38, 1
      %p291 = por %p289, %p290
      %p293 = scmp.ne.s32.totalorder %s276, %s292
      %p294 = scmp.eq.s32.totalorder %s38, 0
      %p295 = por %p293, %p294
      %s296 = ssub.s32 %s40, %s47
      %s297 = ssub.s32 %s39, %s51
      %s298 = sor.u32 %s296, %s297
      %p299 = scmp.eq.s32.totalorder %s298, 0
      %s301 = sadd.s32 %s300, 1
      %s302 = scalar_select %p299, %s300, %s301
      %p305 = pneg %p299
      %p306 = scmp.eq.s32.totalorder %s32, 1
      %p307 = por %p305, %p306
      %p308 = scmp.ne.s32.totalorder %s300, %s303
      %p309 = scmp.eq.s32.totalorder %s32, 0
      %p310 = por %p308, %p309
      %p311 = scmp.ne.s32.totalorder %s300, %s303
      %p312 = scmp.eq.s32.totalorder %s37, 1
      %p313 = por %p311, %p312
      %p314 = scmp.ne.s32.totalorder %s303, %s304
      %p315 = scmp.eq.s32.totalorder %s37, 0
      %p316 = por %p314, %p315
      %p317 = scmp.ne.s32.totalorder %s303, %s304
      %p318 = scmp.eq.s32.totalorder %s38, 1
      %p319 = por %p317, %p318
      %p321 = scmp.ne.s32.totalorder %s304, %s320
      %p322 = scmp.eq.s32.totalorder %s38, 0
      %p323 = por %p321, %p322
      %p324 = scmp.le.s32.totalorder 1, %s32
      %p325 = scmp.lt.s32.totalorder %s32, 3
      %p326 = pnand %p324, %p325
      %p327 = pneg %p326
      // Predicated region
      $region9: #{tpu_custom_call.1} parent=5 // pred_check
        _
      $region10: #{tpu_custom_call.1} parent=5 // pred_check_branch
        %329 = sbr.rel (%p326) target = $region12
      $region11: #{tpu_custom_call.1} parent=5 // pred_region
        %s330 = ssub.s32 %s32, 1
        // Predicated region
        $region13: #{tpu_custom_call.1} parent=11 // pred_check
          %p331 = pneg %p70
        $region14: #{tpu_custom_call.1} parent=11 // pred_check_branch
          %333 = sbr.rel (%p331) target = $region16
        $region15: #{tpu_custom_call.1} parent=11 // pred_region
          %s335 = ssub.s32 128, 128
          %336 = vsyncadd [#allocation4], %s335
          %s337 = smul.addr %s41, 128
          %s338 = scalar_lea.hbm %s0, %s337
          %s340 = sshll.u32 [#allocation3], 4
          %s341 = int_to_ptr.vmem [resolvable:$true] %s340
          %343 = dma.hbm_to_vmem [thread:$0]  %s338, 128, %s341, [#allocation4]
        $region16: #{tpu_custom_call.1} parent=11 // pred_fallthru
          _
        // Predicated region
        $region17: #{tpu_custom_call.1} parent=11 // pred_check
          %p344 = pneg %p180
        $region18: #{tpu_custom_call.1} parent=11 // pred_check_branch
          %346 = sbr.rel (%p344) target = $region20
        $region19: #{tpu_custom_call.1} parent=11 // pred_region
          %p347 = scmp.lt.s32.totalorder %s41, 0
          %s348 = scalar_select %p347, %s41, 0
          %s349 = smul.addr %s348, 8
          %s350 = scalar_lea.vmem %s4, %s349
        $region20: #{tpu_custom_call.1} parent=11 // pred_fallthru
          _
      $region12: #{tpu_custom_call.1} parent=5 // pred_fallthru
        _
      %p351 = scmp.lt.s32.totalorder %s32, 2
      // Predicated region
      $region21: #{tpu_custom_call.1} parent=5 // pred_check
        %p352 = pneg %p351
      $region22: #{tpu_custom_call.1} parent=5 // pred_check_branch
        %354 = sbr.rel (%p352) target = $region24
      $region23: #{tpu_custom_call.1} parent=5 // pred_region
        // Predicated region
        $region25: #{tpu_custom_call.1} parent=23 // pred_check
          %p355 = pneg %p92
        $region26: #{tpu_custom_call.1} parent=23 // pred_check_branch
          %357 = sbr.rel (%p355) target = $region28
        $region27: #{tpu_custom_call.1} parent=23 // pred_region
          %s358 = sand.u32 %s32, 1
          %s359 = scalar_lea.sflag [#allocation7], %s358
          %s360 = sand.u32 %s82, 1
          %s361 = smul.addr %s360, 8
          %s362 = scalar_lea.vmem [#allocation6], %s361
          %s364 = ssub.s32 128, 128
          %365 = vsyncadd %s359, %s364
          %s366 = sadd.s32 %s39, %s40
          %s367 = smul.addr %s366, 128
          %s368 = scalar_lea.hbm %s1, %s367
          %s370 = sshll.u32 %s362, 4
          %s371 = int_to_ptr.vmem [resolvable:$true] %s370
          %373 = dma.hbm_to_vmem [thread:$0]  %s368, 128, %s371, %s359
        $region28: #{tpu_custom_call.1} parent=23 // pred_fallthru
          _
        // Predicated region
        $region29: #{tpu_custom_call.1} parent=23 // pred_check
          %p374 = pneg %p120
        $region30: #{tpu_custom_call.1} parent=23 // pred_check_branch
          %376 = sbr.rel (%p374) target = $region32
        $region31: #{tpu_custom_call.1} parent=23 // pred_region
          %s377 = sand.u32 %s32, 1
          %s378 = scalar_lea.sflag [#allocation7], %s377
          %s379 = sand.u32 %s110, 1
          %s380 = smul.addr %s379, 8
          %s381 = scalar_lea.vmem [#allocation8], %s380
          %s383 = ssub.s32 128, 128
          %384 = vsyncadd %s378, %s383
          %s385 = sadd.s32 %s39, %s40
          %s386 = smul.addr %s385, 128
          %s387 = scalar_lea.hbm %s2, %s386
          %s389 = sshll.u32 %s381, 4
          %s390 = int_to_ptr.vmem [resolvable:$true] %s389
          %392 = dma.hbm_to_vmem [thread:$0]  %s387, 128, %s390, %s378
        $region32: #{tpu_custom_call.1} parent=23 // pred_fallthru
          _
        // Predicated region
        $region33: #{tpu_custom_call.1} parent=23 // pred_check
          %p393 = pneg %p148
        $region34: #{tpu_custom_call.1} parent=23 // pred_check_branch
          %395 = sbr.rel (%p393) target = $region36
        $region35: #{tpu_custom_call.1} parent=23 // pred_region
          %s396 = sand.u32 %s32, 1
          %s397 = scalar_lea.sflag [#allocation10], %s396
          %s398 = sand.u32 %s138, 1
          %s399 = smul.addr %s398, 8
          %s400 = scalar_lea.vmem [#allocation9], %s399
          %s402 = ssub.s32 128, 128
          %403 = vsyncadd %s397, %s402
          %s404 = sadd.s32 %s39, %s40
          %s405 = smul.addr %s404, 128
          %s406 = scalar_lea.hbm %s3, %s405
          %s408 = sshll.u32 %s400, 4
          %s409 = int_to_ptr.vmem [resolvable:$true] %s408
          %411 = dma.hbm_to_vmem [thread:$0]  %s406, 128, %s409, %s397
        $region36: #{tpu_custom_call.1} parent=23 // pred_fallthru
          _
        // Predicated region
        $region37: #{tpu_custom_call.1} parent=23 // pred_check
          %p412 = pneg %p200
        $region38: #{tpu_custom_call.1} parent=23 // pred_check_branch
          %414 = sbr.rel (%p412) target = $region40
        $region39: #{tpu_custom_call.1} parent=23 // pred_region
          %s415 = sand.u32 %s32, 1
          %s416 = scalar_lea.sflag [#allocation10], %s415
          %s417 = sand.u32 %s190, 1
          %s418 = smul.addr %s417, 1152
          %s419 = scalar_lea.vmem [#allocation11], %s418
          %s421 = ssub.s32 18432, 18432
          %422 = vsyncadd %s416, %s421
          %s423 = smul.addr %s40, 288
          %s424 = smul.addr %s423, 64
          %s425 = scalar_lea.hbm %s5, %s424
          %s426 = sshll.u32 %s419, 4
          %s427 = int_to_ptr.vmem [resolvable:$true] %s426
          %432 = dma.hbm_to_vmem [thread:$0]  %s425, 18432, %s427, %s416, 384, 384, 24
        $region40: #{tpu_custom_call.1} parent=23 // pred_fallthru
          _
        // Predicated region
        $region41: #{tpu_custom_call.1} parent=23 // pred_check
          %p433 = pneg %p226
        $region42: #{tpu_custom_call.1} parent=23 // pred_check_branch
          %435 = sbr.rel (%p433) target = $region44
        $region43: #{tpu_custom_call.1} parent=23 // pred_region
          %s436 = sand.u32 %s216, 1
          %s437 = scalar_lea.sflag [#allocation13], %s436
          %s438 = sand.u32 %s216, 1
          %s439 = smul.addr %s438, 6
          %s440 = scalar_lea.vmem [#allocation12], %s439
          %s442 = ssub.s32 96, 96
          %443 = vsyncadd %s437, %s442
          %s444 = smul.addr %s40, 6
          %s445 = smul.addr %s444, 16
          %s446 = scalar_lea.hbm %s6, %s445
          %s448 = sshll.u32 %s440, 4
          %s449 = int_to_ptr.vmem [resolvable:$true] %s448
          %451 = dma.hbm_to_vmem [thread:$0]  %s446, 96, %s449, %s437
        $region44: #{tpu_custom_call.1} parent=23 // pred_fallthru
          _
      $region24: #{tpu_custom_call.1} parent=5 // pred_fallthru
        _
      %p452 = scmp.le.s32.totalorder 1, %s32
      %p453 = scmp.lt.s32.totalorder %s32, 3
      %p454 = pnand %p452, %p453
      %p455 = pneg %p454
      // Predicated region
      $region45: #{tpu_custom_call.1} parent=5 // pred_check
        _
      $region46: #{tpu_custom_call.1} parent=5 // pred_check_branch
        %457 = sbr.rel (%p454) target = $region48
      $region47: #{tpu_custom_call.1} parent=5 // pred_region
        %s458 = ssub.s32 %s32, 1
        // Predicated region
        $region49: #{tpu_custom_call.1} parent=47 // pred_check
          %p459 = pneg %p70
        $region50: #{tpu_custom_call.1} parent=47 // pred_check_branch
          %461 = sbr.rel (%p459) target = $region52
        $region51: #{tpu_custom_call.1} parent=47 // pred_region
          %462 = dma.done [#allocation4], 128
        $region52: #{tpu_custom_call.1} parent=47 // pred_fallthru
          _
        %s463 = sand.u32 %s37, 1
        %s464 = scalar_lea.sflag [#allocation7], %s463
        %s465 = sand.u32 %s85, 1
        %s466 = smul.addr %s465, 8
        %s467 = scalar_lea.vmem [#allocation6], %s466
        // Predicated region
        $region53: #{tpu_custom_call.1} parent=47 // pred_check
          %p468 = pneg %p98
        $region54: #{tpu_custom_call.1} parent=47 // pred_check_branch
          %470 = sbr.rel (%p468) target = $region56
        $region55: #{tpu_custom_call.1} parent=47 // pred_region
          %471 = dma.done %s464, 128
        $region56: #{tpu_custom_call.1} parent=47 // pred_fallthru
          _
        %s472 = sand.u32 %s37, 1
        %s473 = scalar_lea.sflag [#allocation7], %s472
        %s474 = sand.u32 %s113, 1
        %s475 = smul.addr %s474, 8
        %s476 = scalar_lea.vmem [#allocation8], %s475
        // Predicated region
        $region57: #{tpu_custom_call.1} parent=47 // pred_check
          %p477 = pneg %p126
        $region58: #{tpu_custom_call.1} parent=47 // pred_check_branch
          %479 = sbr.rel (%p477) target = $region60
        $region59: #{tpu_custom_call.1} parent=47 // pred_region
          %480 = dma.done %s473, 128
        $region60: #{tpu_custom_call.1} parent=47 // pred_fallthru
          _
        %s481 = sand.u32 %s37, 1
        %s482 = scalar_lea.sflag [#allocation10], %s481
        %s483 = sand.u32 %s141, 1
        %s484 = smul.addr %s483, 8
        %s485 = scalar_lea.vmem [#allocation9], %s484
        // Predicated region
        $region61: #{tpu_custom_call.1} parent=47 // pred_check
          %p486 = pneg %p154
        $region62: #{tpu_custom_call.1} parent=47 // pred_check_branch
          %488 = sbr.rel (%p486) target = $region64
        $region63: #{tpu_custom_call.1} parent=47 // pred_region
          %489 = dma.done %s482, 128
        $region64: #{tpu_custom_call.1} parent=47 // pred_fallthru
          _
        %s490 = sand.u32 %s37, 1
        %s491 = scalar_lea.sflag [#allocation10], %s490
        %s492 = sand.u32 %s193, 1
        %s493 = smul.addr %s492, 1152
        %s494 = scalar_lea.vmem [#allocation11], %s493
        // Predicated region
        $region65: #{tpu_custom_call.1} parent=47 // pred_check
          %p495 = pneg %p206
        $region66: #{tpu_custom_call.1} parent=47 // pred_check_branch
          %497 = sbr.rel (%p495) target = $region68
        $region67: #{tpu_custom_call.1} parent=47 // pred_region
          %498 = dma.done %s491, 18432
        $region68: #{tpu_custom_call.1} parent=47 // pred_fallthru
          _
        %s499 = sand.u32 %s219, 1
        %s500 = scalar_lea.sflag [#allocation13], %s499
        %s501 = sand.u32 %s219, 1
        %s502 = smul.addr %s501, 6
        %s503 = scalar_lea.vmem [#allocation12], %s502
        // Predicated region
        $region69: #{tpu_custom_call.1} parent=47 // pred_check
          %p504 = pneg %p232
        $region70: #{tpu_custom_call.1} parent=47 // pred_check_branch
          %506 = sbr.rel (%p504) target = $region72
        $region71: #{tpu_custom_call.1} parent=47 // pred_region
          %507 = dma.done %s500, 96
        $region72: #{tpu_custom_call.1} parent=47 // pred_fallthru
          _
        %p508 = pneg %p70
        %p509 = pneg %p67
        %s510 = sand.u32 %s37, 1
        %s511 = scalar_lea.sflag [#allocation7], %s510
        %s512 = sand.u32 %s85, 1
        %s513 = smul.addr %s512, 8
        %s514 = scalar_lea.vmem [#allocation6], %s513
        %p515 = pneg %p98
        %p516 = pneg %p95
        %s517 = sand.u32 %s37, 1
        %s518 = scalar_lea.sflag [#allocation7], %s517
        %s519 = sand.u32 %s113, 1
        %s520 = smul.addr %s519, 8
        %s521 = scalar_lea.vmem [#allocation8], %s520
        %p522 = pneg %p126
        %p523 = pneg %p123
        %s524 = sand.u32 %s37, 1
        %s525 = scalar_lea.sflag [#allocation10], %s524
        %s526 = sand.u32 %s141, 1
        %s527 = smul.addr %s526, 8
        %s528 = scalar_lea.vmem [#allocation9], %s527
        %p529 = pneg %p154
        %p530 = pneg %p151
        %p531 = scmp.lt.s32.totalorder %s41, 0
        %s532 = scalar_select %p531, %s41, 0
        %s533 = smul.addr %s532, 8
        %s534 = scalar_lea.vmem %s4, %s533
        %p535 = pneg %p180
        %p536 = pneg %p177
        %s537 = sand.u32 %s37, 1
        %s538 = scalar_lea.sflag [#allocation10], %s537
        %s539 = sand.u32 %s193, 1
        %s540 = smul.addr %s539, 1152
        %s541 = scalar_lea.vmem [#allocation11], %s540
        %p542 = pneg %p206
        %p543 = pneg %p203
        %s544 = sand.u32 %s219, 1
        %s545 = scalar_lea.sflag [#allocation13], %s544
        %s546 = sand.u32 %s219, 1
        %s547 = smul.addr %s546, 6
        %s548 = scalar_lea.vmem [#allocation12], %s547
        %p549 = pneg %p232
        %p550 = pneg %p229
        %p551 = pneg %p260
        %p552 = pneg %p257
        %s553 = sand.u32 %s247, 1
        %s554 = scalar_lea.sflag [#allocation5], %s553
        %s555 = sand.u32 %s247, 1
        %s556 = smul.addr %s555, 8
        %s557 = scalar_lea.vmem [#allocation14], %s556
        %p558 = pneg %p288
        %p559 = pneg %p285
        %s560 = sand.u32 %s37, 1
        %s561 = scalar_lea.sflag [#allocation16], %s560
        %s562 = sand.u32 %s275, 1
        %s563 = smul.addr %s562, 8
        %s564 = scalar_lea.vmem [#allocation15], %s563
        %p565 = pneg %p316
        %p566 = pneg %p313
        %s567 = sand.u32 %s37, 1
        %s568 = scalar_lea.sflag [#allocation16], %s567
        %s569 = sand.u32 %s303, 1
        %s570 = smul.addr %s569, 16
        %s571 = scalar_lea.vmem [#allocation17], %s570
        %p572 = scmp.lt.s32.totalorder %s41, 0
        %s573 = scalar_select %p572, %s41, 0
        %s574 = smul.addr %s573, 8
        %s575 = scalar_lea.vmem %s4, %s574
        %p577 = scmp.eq.s32.totalorder %s42, 0
        // Predicated region
        $region73: #{tpu_custom_call.1} parent=47 // pred_check
          %p578 = pneg %p577
        $region74: #{tpu_custom_call.1} parent=47 // pred_check_branch
          %580 = sbr.rel (%p578) target = $region76
        $region75: #{tpu_custom_call.1} parent=47 // pred_region
          %581 = vst [vmem:[#allocation2] sm:$0xff] 0.0
          %582 = vst [vmem:[#allocation2 + $0x8] sm:$0xff] 0.0
          %583 = vst [vmem:[#allocation2 + $0x10] sm:$0xff] 0.0
          %v584 = vld [vmem:[#allocation3] sm:$0xff]
          %585 = vst [vmem:[#allocation2] sm:$0xff] %v584
        $region76: #{tpu_custom_call.1} parent=47 // pred_fallthru
          _
        %v586 = vld [vmem:[%s467] sm:$0xff]
        %587 = vst [vmem:[#allocation2 + $0x8] sm:$0xff] %v586
        %v588 = vld [vmem:[%s485] sm:$0xff]
        %589 = vst [vmem:[#allocation2 + $0x10] sm:$0xff] %v588
        %v590 = vld [vmem:[#allocation2] sm:$0xff]
        %v591 = vld [vmem:[#allocation2 + $0x8] sm:$0xff]
        %v592 = vld [vmem:[#allocation2 + $0x10] sm:$0xff]
        %v593 = vpack.c.bf16 %v590, %v590
        %v594 = vpack.c.bf16 %v591, %v591
        %v595 = vpack.c.bf16 %v592, %v592
        %v596 = vld [vmem:[%s494] sm:$0xff]
        %v597 = vld [vmem:[%s494 + $0x8] sm:$0xff]
        %v598 = vld [vmem:[%s494 + $0x10] sm:$0xff]
        %v599 = vld [vmem:[%s494 + $0x18] sm:$0xff]
        %v600 = vld [vmem:[%s494 + $0x20] sm:$0xff]
        %v601 = vld [vmem:[%s494 + $0x28] sm:$0xff]
        %v602 = vld [vmem:[%s494 + $0x30] sm:$0xff]
        %v603 = vld [vmem:[%s494 + $0x38] sm:$0xff]
        %v604 = vld [vmem:[%s494 + $0x40] sm:$0xff]
        %v605 = vld [vmem:[%s494 + $0x48] sm:$0xff]
        %v606 = vld [vmem:[%s494 + $0x50] sm:$0xff]
        %v607 = vld [vmem:[%s494 + $0x58] sm:$0xff]
        %v608 = vld [vmem:[%s494 + $0x60] sm:$0xff]
        %v609 = vld [vmem:[%s494 + $0x68] sm:$0xff]
        %v610 = vld [vmem:[%s494 + $0x70] sm:$0xff]
        %v611 = vld [vmem:[%s494 + $0x78] sm:$0xff]
        %v612 = vld [vmem:[%s494 + $0x80] sm:$0xff]
        %v613 = vld [vmem:[%s494 + $0x88] sm:$0xff]
        %v614 = vld [vmem:[%s494 + $0x90] sm:$0xff]
        %v615 = vld [vmem:[%s494 + $0x98] sm:$0xff]
        %v616 = vld [vmem:[%s494 + $0xa0] sm:$0xff]
        %v617 = vld [vmem:[%s494 + $0xa8] sm:$0xff]
        %v618 = vld [vmem:[%s494 + $0xb0] sm:$0xff]
        %v619 = vld [vmem:[%s494 + $0xb8] sm:$0xff]
        %v620 = vld [vmem:[%s494 + $0xc0] sm:$0xff]
        %v621 = vld [vmem:[%s494 + $0xc8] sm:$0xff]
        %v622 = vld [vmem:[%s494 + $0xd0] sm:$0xff]
        %v623 = vld [vmem:[%s494 + $0xd8] sm:$0xff]
        %v624 = vld [vmem:[%s494 + $0xe0] sm:$0xff]
        %v625 = vld [vmem:[%s494 + $0xe8] sm:$0xff]
        %v626 = vld [vmem:[%s494 + $0xf0] sm:$0xff]
        %v627 = vld [vmem:[%s494 + $0xf8] sm:$0xff]
        %v628 = vld [vmem:[%s494 + $0x100] sm:$0xff]
        %v629 = vld [vmem:[%s494 + $0x108] sm:$0xff]
        %v630 = vld [vmem:[%s494 + $0x110] sm:$0xff]
        %v631 = vld [vmem:[%s494 + $0x118] sm:$0xff]
        %v632 = vld [vmem:[%s494 + $0x120] sm:$0xff]
        %v633 = vld [vmem:[%s494 + $0x128] sm:$0xff]
        %v634 = vld [vmem:[%s494 + $0x130] sm:$0xff]
        %v635 = vld [vmem:[%s494 + $0x138] sm:$0xff]
        %v636 = vld [vmem:[%s494 + $0x140] sm:$0xff]
        %v637 = vld [vmem:[%s494 + $0x148] sm:$0xff]
        %v638 = vld [vmem:[%s494 + $0x150] sm:$0xff]
        %v639 = vld [vmem:[%s494 + $0x158] sm:$0xff]
        %v640 = vld [vmem:[%s494 + $0x160] sm:$0xff]
        %v641 = vld [vmem:[%s494 + $0x168] sm:$0xff]
        %v642 = vld [vmem:[%s494 + $0x170] sm:$0xff]
        %v643 = vld [vmem:[%s494 + $0x178] sm:$0xff]
        %v644 = vld [vmem:[%s494 + $0x180] sm:$0xff]
        %v645 = vld [vmem:[%s494 + $0x188] sm:$0xff]
        %v646 = vld [vmem:[%s494 + $0x190] sm:$0xff]
        %v647 = vld [vmem:[%s494 + $0x198] sm:$0xff]
        %v648 = vld [vmem:[%s494 + $0x1a0] sm:$0xff]
        %v649 = vld [vmem:[%s494 + $0x1a8] sm:$0xff]
        %v650 = vld [vmem:[%s494 + $0x1b0] sm:$0xff]
        %v651 = vld [vmem:[%s494 + $0x1b8] sm:$0xff]
        %v652 = vld [vmem:[%s494 + $0x1c0] sm:$0xff]
        %v653 = vld [vmem:[%s494 + $0x1c8] sm:$0xff]
        %v654 = vld [vmem:[%s494 + $0x1d0] sm:$0xff]
        %v655 = vld [vmem:[%s494 + $0x1d8] sm:$0xff]
        %v656 = vld [vmem:[%s494 + $0x1e0] sm:$0xff]
        %v657 = vld [vmem:[%s494 + $0x1e8] sm:$0xff]
        %v658 = vld [vmem:[%s494 + $0x1f0] sm:$0xff]
        %v659 = vld [vmem:[%s494 + $0x1f8] sm:$0xff]
        %v660 = vld [vmem:[%s494 + $0x200] sm:$0xff]
        %v661 = vld [vmem:[%s494 + $0x208] sm:$0xff]
        %v662 = vld [vmem:[%s494 + $0x210] sm:$0xff]
        %v663 = vld [vmem:[%s494 + $0x218] sm:$0xff]
        %v664 = vld [vmem:[%s494 + $0x220] sm:$0xff]
        %v665 = vld [vmem:[%s494 + $0x228] sm:$0xff]
        %v666 = vld [vmem:[%s494 + $0x230] sm:$0xff]
        %v667 = vld [vmem:[%s494 + $0x238] sm:$0xff]
        %v668 = vld [vmem:[%s494 + $0x240] sm:$0xff]
        %v669 = vld [vmem:[%s494 + $0x248] sm:$0xff]
        %v670 = vld [vmem:[%s494 + $0x250] sm:$0xff]
        %v671 = vld [vmem:[%s494 + $0x258] sm:$0xff]
        %v672 = vld [vmem:[%s494 + $0x260] sm:$0xff]
        %v673 = vld [vmem:[%s494 + $0x268] sm:$0xff]
        %v674 = vld [vmem:[%s494 + $0x270] sm:$0xff]
        %v675 = vld [vmem:[%s494 + $0x278] sm:$0xff]
        %v676 = vld [vmem:[%s494 + $0x280] sm:$0xff]
        %v677 = vld [vmem:[%s494 + $0x288] sm:$0xff]
        %v678 = vld [vmem:[%s494 + $0x290] sm:$0xff]
        %v679 = vld [vmem:[%s494 + $0x298] sm:$0xff]
        %v680 = vld [vmem:[%s494 + $0x2a0] sm:$0xff]
        %v681 = vld [vmem:[%s494 + $0x2a8] sm:$0xff]
        %v682 = vld [vmem:[%s494 + $0x2b0] sm:$0xff]
        %v683 = vld [vmem:[%s494 + $0x2b8] sm:$0xff]
        %v684 = vld [vmem:[%s494 + $0x2c0] sm:$0xff]
        %v685 = vld [vmem:[%s494 + $0x2c8] sm:$0xff]
        %v686 = vld [vmem:[%s494 + $0x2d0] sm:$0xff]
        %v687 = vld [vmem:[%s494 + $0x2d8] sm:$0xff]
        %v688 = vld [vmem:[%s494 + $0x2e0] sm:$0xff]
        %v689 = vld [vmem:[%s494 + $0x2e8] sm:$0xff]
        %v690 = vld [vmem:[%s494 + $0x2f0] sm:$0xff]
        %v691 = vld [vmem:[%s494 + $0x2f8] sm:$0xff]
        %v692 = vld [vmem:[%s494 + $0x300] sm:$0xff]
        %v693 = vld [vmem:[%s494 + $0x308] sm:$0xff]
        %v694 = vld [vmem:[%s494 + $0x310] sm:$0xff]
        %v695 = vld [vmem:[%s494 + $0x318] sm:$0xff]
        %v696 = vld [vmem:[%s494 + $0x320] sm:$0xff]
        %v697 = vld [vmem:[%s494 + $0x328] sm:$0xff]
        %v698 = vld [vmem:[%s494 + $0x330] sm:$0xff]
        %v699 = vld [vmem:[%s494 + $0x338] sm:$0xff]
        %v700 = vld [vmem:[%s494 + $0x340] sm:$0xff]
        %v701 = vld [vmem:[%s494 + $0x348] sm:$0xff]
        %v702 = vld [vmem:[%s494 + $0x350] sm:$0xff]
        %v703 = vld [vmem:[%s494 + $0x358] sm:$0xff]
        %v704 = vld [vmem:[%s494 + $0x360] sm:$0xff]
        %v705 = vld [vmem:[%s494 + $0x368] sm:$0xff]
        %v706 = vld [vmem:[%s494 + $0x370] sm:$0xff]
        %v707 = vld [vmem:[%s494 + $0x378] sm:$0xff]
        %v708 = vld [vmem:[%s494 + $0x380] sm:$0xff]
        %v709 = vld [vmem:[%s494 + $0x388] sm:$0xff]
        %v710 = vld [vmem:[%s494 + $0x390] sm:$0xff]
        %v711 = vld [vmem:[%s494 + $0x398] sm:$0xff]
        %v712 = vld [vmem:[%s494 + $0x3a0] sm:$0xff]
        %v713 = vld [vmem:[%s494 + $0x3a8] sm:$0xff]
        %v714 = vld [vmem:[%s494 + $0x3b0] sm:$0xff]
        %v715 = vld [vmem:[%s494 + $0x3b8] sm:$0xff]
        %v716 = vld [vmem:[%s494 + $0x3c0] sm:$0xff]
        %v717 = vld [vmem:[%s494 + $0x3c8] sm:$0xff]
        %v718 = vld [vmem:[%s494 + $0x3d0] sm:$0xff]
        %v719 = vld [vmem:[%s494 + $0x3d8] sm:$0xff]
        %v720 = vld [vmem:[%s494 + $0x3e0] sm:$0xff]
        %v721 = vld [vmem:[%s494 + $0x3e8] sm:$0xff]
        %v722 = vld [vmem:[%s494 + $0x3f0] sm:$0xff]
        %v723 = vld [vmem:[%s494 + $0x3f8] sm:$0xff]
        %v724 = vld [vmem:[%s494 + $0x400] sm:$0xff]
        %v725 = vld [vmem:[%s494 + $0x408] sm:$0xff]
        %v726 = vld [vmem:[%s494 + $0x410] sm:$0xff]
        %v727 = vld [vmem:[%s494 + $0x418] sm:$0xff]
        %v728 = vld [vmem:[%s494 + $0x420] sm:$0xff]
        %v729 = vld [vmem:[%s494 + $0x428] sm:$0xff]
        %v730 = vld [vmem:[%s494 + $0x430] sm:$0xff]
        %v731 = vld [vmem:[%s494 + $0x438] sm:$0xff]
        %v732 = vld [vmem:[%s494 + $0x440] sm:$0xff]
        %v733 = vld [vmem:[%s494 + $0x448] sm:$0xff]
        %v734 = vld [vmem:[%s494 + $0x450] sm:$0xff]
        %v735 = vld [vmem:[%s494 + $0x458] sm:$0xff]
        %v736 = vld [vmem:[%s494 + $0x460] sm:$0xff]
        %v737 = vld [vmem:[%s494 + $0x468] sm:$0xff]
        %v738 = vld [vmem:[%s494 + $0x470] sm:$0xff]
        %v739 = vld [vmem:[%s494 + $0x478] sm:$0xff]
        %v740 = vld [vmem:[%s503] sm:$0x3f]
        %v742 = vlaneseq
        %v743 = vshrl.u32 %v742, 7
        %v744 = vsub.s32 0, %v743
        %v745 = vrot.slane %v740, %v744
        %v746 = vlaneseq
        %v747 = vshrl.u32 %v746, 7
        %v748 = vsub.s32 1, %v747
        %v749 = vrot.slane %v740, %v748
        %v750 = vlaneseq
        %v751 = vshrl.u32 %v750, 7
        %v752 = vsub.s32 2, %v751
        %v753 = vrot.slane %v740, %v752
        %v754 = vlaneseq
        %v755 = vshrl.u32 %v754, 7
        %v756 = vsub.s32 3, %v755
        %v757 = vrot.slane %v740, %v756
        %v758 = vlaneseq
        %v759 = vshrl.u32 %v758, 7
        %v760 = vsub.s32 4, %v759
        %v761 = vrot.slane %v740, %v760
        %v762 = vlaneseq
        %v763 = vshrl.u32 %v762, 7
        %v764 = vsub.s32 5, %v763
        %v765 = vrot.slane %v740, %v764
        %v916 = vunpack.c.l.b16 %v596
        %v917 = vunpack.c.h.b16 %v596
        %v918 = vunpack.c.l.b16 %v597
        %v919 = vunpack.c.h.b16 %v597
        %v920 = vunpack.c.l.b16 %v598
        %v921 = vunpack.c.h.b16 %v598
        %v922 = vunpack.c.l.b16 %v599
        %v923 = vunpack.c.h.b16 %v599
        %v924 = vunpack.c.l.b16 %v600
        %v925 = vunpack.c.h.b16 %v600
        %v926 = vunpack.c.l.b16 %v601
        %v927 = vunpack.c.h.b16 %v601
        %v928 = vunpack.c.l.b16 %v602
        %v929 = vunpack.c.h.b16 %v602
        %v930 = vunpack.c.l.b16 %v603
        %v931 = vunpack.c.h.b16 %v603
        %v932 = vunpack.c.l.b16 %v604
        %v933 = vunpack.c.h.b16 %v604
        %v934 = vunpack.c.l.b16 %v605
        %v935 = vunpack.c.h.b16 %v605
        %v936 = vunpack.c.l.b16 %v606
        %v937 = vunpack.c.h.b16 %v606
        %v938 = vunpack.c.l.b16 %v607
        %v939 = vunpack.c.h.b16 %v607
        %v940 = vunpack.c.l.b16 %v608
        %v941 = vunpack.c.h.b16 %v608
        %v942 = vunpack.c.l.b16 %v609
        %v943 = vunpack.c.h.b16 %v609
        %v944 = vunpack.c.l.b16 %v610
        %v945 = vunpack.c.h.b16 %v610
        %v946 = vunpack.c.l.b16 %v611
        %v947 = vunpack.c.h.b16 %v611
        %v948 = vunpack.c.l.b16 %v612
        %v949 = vunpack.c.h.b16 %v612
        %v950 = vunpack.c.l.b16 %v613
        %v951 = vunpack.c.h.b16 %v613
        %v952 = vunpack.c.l.b16 %v614
        %v953 = vunpack.c.h.b16 %v614
        %v954 = vunpack.c.l.b16 %v615
        %v955 = vunpack.c.h.b16 %v615
        %v956 = vunpack.c.l.b16 %v616
        %v957 = vunpack.c.h.b16 %v616
        %v958 = vunpack.c.l.b16 %v617
        %v959 = vunpack.c.h.b16 %v617
        %v960 = vunpack.c.l.b16 %v618
        %v961 = vunpack.c.h.b16 %v618
        %v962 = vunpack.c.l.b16 %v619
        %v963 = vunpack.c.h.b16 %v619
        %v964 = vunpack.c.l.b16 %v620
        %v965 = vunpack.c.h.b16 %v620
        %v966 = vunpack.c.l.b16 %v621
        %v967 = vunpack.c.h.b16 %v621
        %v968 = vunpack.c.l.b16 %v622
        %v969 = vunpack.c.h.b16 %v622
        %v970 = vunpack.c.l.b16 %v623
        %v971 = vunpack.c.h.b16 %v623
        %v972 = vunpack.c.l.b16 %v624
        %v973 = vunpack.c.h.b16 %v624
        %v974 = vunpack.c.l.b16 %v625
        %v975 = vunpack.c.h.b16 %v625
        %v976 = vunpack.c.l.b16 %v626
        %v977 = vunpack.c.h.b16 %v626
        %v978 = vunpack.c.l.b16 %v627
        %v979 = vunpack.c.h.b16 %v627
        %v980 = vunpack.c.l.b16 %v628
        %v981 = vunpack.c.h.b16 %v628
        %v982 = vunpack.c.l.b16 %v629
        %v983 = vunpack.c.h.b16 %v629
        %v984 = vunpack.c.l.b16 %v630
        %v985 = vunpack.c.h.b16 %v630
        %v986 = vunpack.c.l.b16 %v631
        %v987 = vunpack.c.h.b16 %v631
        %v988 = vunpack.c.l.b16 %v632
        %v989 = vunpack.c.h.b16 %v632
        %v990 = vunpack.c.l.b16 %v633
        %v991 = vunpack.c.h.b16 %v633
        %v992 = vunpack.c.l.b16 %v634
        %v993 = vunpack.c.h.b16 %v634
        %v994 = vunpack.c.l.b16 %v635
        %v995 = vunpack.c.h.b16 %v635
        %v996 = vunpack.c.l.b16 %v636
        %v997 = vunpack.c.h.b16 %v636
        %v998 = vunpack.c.l.b16 %v637
        %v999 = vunpack.c.h.b16 %v637
        %v1000 = vunpack.c.l.b16 %v638
        %v1001 = vunpack.c.h.b16 %v638
        %v1002 = vunpack.c.l.b16 %v639
        %v1003 = vunpack.c.h.b16 %v639
        %v1004 = vunpack.c.l.b16 %v640
        %v1005 = vunpack.c.h.b16 %v640
        %v1006 = vunpack.c.l.b16 %v641
        %v1007 = vunpack.c.h.b16 %v641
        %v1008 = vunpack.c.l.b16 %v642
        %v1009 = vunpack.c.h.b16 %v642
        %v1010 = vunpack.c.l.b16 %v643
        %v1011 = vunpack.c.h.b16 %v643
        %v1012 = vunpack.c.l.b16 %v644
        %v1013 = vunpack.c.h.b16 %v644
        %v1014 = vunpack.c.l.b16 %v645
        %v1015 = vunpack.c.h.b16 %v645
        %v1016 = vunpack.c.l.b16 %v646
        %v1017 = vunpack.c.h.b16 %v646
        %v1018 = vunpack.c.l.b16 %v647
        %v1019 = vunpack.c.h.b16 %v647
        %v1020 = vunpack.c.l.b16 %v648
        %v1021 = vunpack.c.h.b16 %v648
        %v1022 = vunpack.c.l.b16 %v649
        %v1023 = vunpack.c.h.b16 %v649
        %v1024 = vunpack.c.l.b16 %v650
        %v1025 = vunpack.c.h.b16 %v650
        %v1026 = vunpack.c.l.b16 %v651
        %v1027 = vunpack.c.h.b16 %v651
        %v1028 = vunpack.c.l.b16 %v652
        %v1029 = vunpack.c.h.b16 %v652
        %v1030 = vunpack.c.l.b16 %v653
        %v1031 = vunpack.c.h.b16 %v653
        %v1032 = vunpack.c.l.b16 %v654
        %v1033 = vunpack.c.h.b16 %v654
        %v1034 = vunpack.c.l.b16 %v655
        %v1035 = vunpack.c.h.b16 %v655
        %v1036 = vunpack.c.l.b16 %v656
        %v1037 = vunpack.c.h.b16 %v656
        %v1038 = vunpack.c.l.b16 %v657
        %v1039 = vunpack.c.h.b16 %v657
        %v1040 = vunpack.c.l.b16 %v658
        %v1041 = vunpack.c.h.b16 %v658
        %v1042 = vunpack.c.l.b16 %v659
        %v1043 = vunpack.c.h.b16 %v659
        %v1044 = vunpack.c.l.b16 %v660
        %v1045 = vunpack.c.h.b16 %v660
        %v1046 = vunpack.c.l.b16 %v661
        %v1047 = vunpack.c.h.b16 %v661
        %v1048 = vunpack.c.l.b16 %v662
        %v1049 = vunpack.c.h.b16 %v662
        %v1050 = vunpack.c.l.b16 %v663
        %v1051 = vunpack.c.h.b16 %v663
        %v1052 = vunpack.c.l.b16 %v664
        %v1053 = vunpack.c.h.b16 %v664
        %v1054 = vunpack.c.l.b16 %v665
        %v1055 = vunpack.c.h.b16 %v665
        %v1056 = vunpack.c.l.b16 %v666
        %v1057 = vunpack.c.h.b16 %v666
        %v1058 = vunpack.c.l.b16 %v667
        %v1059 = vunpack.c.h.b16 %v667
        %v1060 = vunpack.c.l.b16 %v668
        %v1061 = vunpack.c.h.b16 %v668
        %v1062 = vunpack.c.l.b16 %v669
        %v1063 = vunpack.c.h.b16 %v669
        %v1064 = vunpack.c.l.b16 %v670
        %v1065 = vunpack.c.h.b16 %v670
        %v1066 = vunpack.c.l.b16 %v671
        %v1067 = vunpack.c.h.b16 %v671
        %v1068 = vunpack.c.l.b16 %v672
        %v1069 = vunpack.c.h.b16 %v672
        %v1070 = vunpack.c.l.b16 %v673
        %v1071 = vunpack.c.h.b16 %v673
        %v1072 = vunpack.c.l.b16 %v674
        %v1073 = vunpack.c.h.b16 %v674
        %v1074 = vunpack.c.l.b16 %v675
        %v1075 = vunpack.c.h.b16 %v675
        %v1076 = vunpack.c.l.b16 %v676
        %v1077 = vunpack.c.h.b16 %v676
        %v1078 = vunpack.c.l.b16 %v677
        %v1079 = vunpack.c.h.b16 %v677
        %v1080 = vunpack.c.l.b16 %v678
        %v1081 = vunpack.c.h.b16 %v678
        %v1082 = vunpack.c.l.b16 %v679
        %v1083 = vunpack.c.h.b16 %v679
        %v1084 = vunpack.c.l.b16 %v680
        %v1085 = vunpack.c.h.b16 %v680
        %v1086 = vunpack.c.l.b16 %v681
        %v1087 = vunpack.c.h.b16 %v681
        %v1088 = vunpack.c.l.b16 %v682
        %v1089 = vunpack.c.h.b16 %v682
        %v1090 = vunpack.c.l.b16 %v683
        %v1091 = vunpack.c.h.b16 %v683
        %v1092 = vunpack.c.l.b16 %v684
        %v1093 = vunpack.c.h.b16 %v684
        %v1094 = vunpack.c.l.b16 %v685
        %v1095 = vunpack.c.h.b16 %v685
        %v1096 = vunpack.c.l.b16 %v686
        %v1097 = vunpack.c.h.b16 %v686
        %v1098 = vunpack.c.l.b16 %v687
        %v1099 = vunpack.c.h.b16 %v687
        %v1100 = vunpack.c.l.b16 %v688
        %v1101 = vunpack.c.h.b16 %v688
        %v1102 = vunpack.c.l.b16 %v689
        %v1103 = vunpack.c.h.b16 %v689
        %v1104 = vunpack.c.l.b16 %v690
        %v1105 = vunpack.c.h.b16 %v690
        %v1106 = vunpack.c.l.b16 %v691
        %v1107 = vunpack.c.h.b16 %v691
        %v1108 = vunpack.c.l.b16 %v692
        %v1109 = vunpack.c.h.b16 %v692
        %v1110 = vunpack.c.l.b16 %v693
        %v1111 = vunpack.c.h.b16 %v693
        %v1112 = vunpack.c.l.b16 %v694
        %v1113 = vunpack.c.h.b16 %v694
        %v1114 = vunpack.c.l.b16 %v695
        %v1115 = vunpack.c.h.b16 %v695
        %v1116 = vunpack.c.l.b16 %v696
        %v1117 = vunpack.c.h.b16 %v696
        %v1118 = vunpack.c.l.b16 %v697
        %v1119 = vunpack.c.h.b16 %v697
        %v1120 = vunpack.c.l.b16 %v698
        %v1121 = vunpack.c.h.b16 %v698
        %v1122 = vunpack.c.l.b16 %v699
        %v1123 = vunpack.c.h.b16 %v699
        %v1124 = vunpack.c.l.b16 %v700
        %v1125 = vunpack.c.h.b16 %v700
        %v1126 = vunpack.c.l.b16 %v701
        %v1127 = vunpack.c.h.b16 %v701
        %v1128 = vunpack.c.l.b16 %v702
        %v1129 = vunpack.c.h.b16 %v702
        %v1130 = vunpack.c.l.b16 %v703
        %v1131 = vunpack.c.h.b16 %v703
        %v1132 = vunpack.c.l.b16 %v704
        %v1133 = vunpack.c.h.b16 %v704
        %v1134 = vunpack.c.l.b16 %v705
        %v1135 = vunpack.c.h.b16 %v705
        %v1136 = vunpack.c.l.b16 %v706
        %v1137 = vunpack.c.h.b16 %v706
        %v1138 = vunpack.c.l.b16 %v707
        %v1139 = vunpack.c.h.b16 %v707
        %v1140 = vunpack.c.l.b16 %v708
        %v1141 = vunpack.c.h.b16 %v708
        %v1142 = vunpack.c.l.b16 %v709
        %v1143 = vunpack.c.h.b16 %v709
        %v1144 = vunpack.c.l.b16 %v710
        %v1145 = vunpack.c.h.b16 %v710
        %v1146 = vunpack.c.l.b16 %v711
        %v1147 = vunpack.c.h.b16 %v711
        %v1148 = vunpack.c.l.b16 %v712
        %v1149 = vunpack.c.h.b16 %v712
        %v1150 = vunpack.c.l.b16 %v713
        %v1151 = vunpack.c.h.b16 %v713
        %v1152 = vunpack.c.l.b16 %v714
        %v1153 = vunpack.c.h.b16 %v714
        %v1154 = vunpack.c.l.b16 %v715
        %v1155 = vunpack.c.h.b16 %v715
        %v1156 = vunpack.c.l.b16 %v716
        %v1157 = vunpack.c.h.b16 %v716
        %v1158 = vunpack.c.l.b16 %v717
        %v1159 = vunpack.c.h.b16 %v717
        %v1160 = vunpack.c.l.b16 %v718
        %v1161 = vunpack.c.h.b16 %v718
        %v1162 = vunpack.c.l.b16 %v719
        %v1163 = vunpack.c.h.b16 %v719
        %v1164 = vunpack.c.l.b16 %v720
        %v1165 = vunpack.c.h.b16 %v720
        %v1166 = vunpack.c.l.b16 %v721
        %v1167 = vunpack.c.h.b16 %v721
        %v1168 = vunpack.c.l.b16 %v722
        %v1169 = vunpack.c.h.b16 %v722
        %v1170 = vunpack.c.l.b16 %v723
        %v1171 = vunpack.c.h.b16 %v723
        %v1172 = vunpack.c.l.b16 %v724
        %v1173 = vunpack.c.h.b16 %v724
        %v1174 = vunpack.c.l.b16 %v725
        %v1175 = vunpack.c.h.b16 %v725
        %v1176 = vunpack.c.l.b16 %v726
        %v1177 = vunpack.c.h.b16 %v726
        %v1178 = vunpack.c.l.b16 %v727
        %v1179 = vunpack.c.h.b16 %v727
        %v1180 = vunpack.c.l.b16 %v728
        %v1181 = vunpack.c.h.b16 %v728
        %v1182 = vunpack.c.l.b16 %v729
        %v1183 = vunpack.c.h.b16 %v729
        %v1184 = vunpack.c.l.b16 %v730
        %v1185 = vunpack.c.h.b16 %v730
        %v1186 = vunpack.c.l.b16 %v731
        %v1187 = vunpack.c.h.b16 %v731
        %v1188 = vunpack.c.l.b16 %v732
        %v1189 = vunpack.c.h.b16 %v732
        %v1190 = vunpack.c.l.b16 %v733
        %v1191 = vunpack.c.h.b16 %v733
        %v1192 = vunpack.c.l.b16 %v734
        %v1193 = vunpack.c.h.b16 %v734
        %v1194 = vunpack.c.l.b16 %v735
        %v1195 = vunpack.c.h.b16 %v735
        %v1196 = vunpack.c.l.b16 %v736
        %v1197 = vunpack.c.h.b16 %v736
        %v1198 = vunpack.c.l.b16 %v737
        %v1199 = vunpack.c.h.b16 %v737
        %v1200 = vunpack.c.l.b16 %v738
        %v1201 = vunpack.c.h.b16 %v738
        %v1202 = vunpack.c.l.b16 %v739
        %v1203 = vunpack.c.h.b16 %v739
        %v1204 = vpack.c.b16 %v922, %v916
        %v1205 = vpack.c.b16 %v923, %v917
        %v1206 = vpack.c.b16 %v924, %v918
        %v1207 = vpack.c.b16 %v925, %v919
        %v1208 = vpack.c.b16 %v926, %v920
        %v1209 = vpack.c.b16 %v927, %v921
        %v1210 = vpack.c.b16 %v934, %v928
        %v1211 = vpack.c.b16 %v935, %v929
        %v1212 = vpack.c.b16 %v936, %v930
        %v1213 = vpack.c.b16 %v937, %v931
        %v1214 = vpack.c.b16 %v938, %v932
        %v1215 = vpack.c.b16 %v939, %v933
        %v1216 = vpack.c.b16 %v946, %v940
        %v1217 = vpack.c.b16 %v947, %v941
        %v1218 = vpack.c.b16 %v948, %v942
        %v1219 = vpack.c.b16 %v949, %v943
        %v1220 = vpack.c.b16 %v950, %v944
        %v1221 = vpack.c.b16 %v951, %v945
        %v1222 = vpack.c.b16 %v958, %v952
        %v1223 = vpack.c.b16 %v959, %v953
        %v1224 = vpack.c.b16 %v960, %v954
        %v1225 = vpack.c.b16 %v961, %v955
        %v1226 = vpack.c.b16 %v962, %v956
        %v1227 = vpack.c.b16 %v963, %v957
        %v1228 = vpack.c.b16 %v970, %v964
        %v1229 = vpack.c.b16 %v971, %v965
        %v1230 = vpack.c.b16 %v972, %v966
        %v1231 = vpack.c.b16 %v973, %v967
        %v1232 = vpack.c.b16 %v974, %v968
        %v1233 = vpack.c.b16 %v975, %v969
        %v1234 = vpack.c.b16 %v982, %v976
        %v1235 = vpack.c.b16 %v983, %v977
        %v1236 = vpack.c.b16 %v984, %v978
        %v1237 = vpack.c.b16 %v985, %v979
        %v1238 = vpack.c.b16 %v986, %v980
        %v1239 = vpack.c.b16 %v987, %v981
        %v1240 = vpack.c.b16 %v994, %v988
        %v1241 = vpack.c.b16 %v995, %v989
        %v1242 = vpack.c.b16 %v996, %v990
        %v1243 = vpack.c.b16 %v997, %v991
        %v1244 = vpack.c.b16 %v998, %v992
        %v1245 = vpack.c.b16 %v999, %v993
        %v1246 = vpack.c.b16 %v1006, %v1000
        %v1247 = vpack.c.b16 %v1007, %v1001
        %v1248 = vpack.c.b16 %v1008, %v1002
        %v1249 = vpack.c.b16 %v1009, %v1003
        %v1250 = vpack.c.b16 %v1010, %v1004
        %v1251 = vpack.c.b16 %v1011, %v1005
        %v1252 = vpack.c.b16 %v1018, %v1012
        %v1253 = vpack.c.b16 %v1019, %v1013
        %v1254 = vpack.c.b16 %v1020, %v1014
        %v1255 = vpack.c.b16 %v1021, %v1015
        %v1256 = vpack.c.b16 %v1022, %v1016
        %v1257 = vpack.c.b16 %v1023, %v1017
        %v1258 = vpack.c.b16 %v1030, %v1024
        %v1259 = vpack.c.b16 %v1031, %v1025
        %v1260 = vpack.c.b16 %v1032, %v1026
        %v1261 = vpack.c.b16 %v1033, %v1027
        %v1262 = vpack.c.b16 %v1034, %v1028
        %v1263 = vpack.c.b16 %v1035, %v1029
        %v1264 = vpack.c.b16 %v1042, %v1036
        %v1265 = vpack.c.b16 %v1043, %v1037
        %v1266 = vpack.c.b16 %v1044, %v1038
        %v1267 = vpack.c.b16 %v1045, %v1039
        %v1268 = vpack.c.b16 %v1046, %v1040
        %v1269 = vpack.c.b16 %v1047, %v1041
        %v1270 = vpack.c.b16 %v1054, %v1048
        %v1271 = vpack.c.b16 %v1055, %v1049
        %v1272 = vpack.c.b16 %v1056, %v1050
        %v1273 = vpack.c.b16 %v1057, %v1051
        %v1274 = vpack.c.b16 %v1058, %v1052
        %v1275 = vpack.c.b16 %v1059, %v1053
        %v1276 = vpack.c.b16 %v1066, %v1060
        %v1277 = vpack.c.b16 %v1067, %v1061
        %v1278 = vpack.c.b16 %v1068, %v1062
        %v1279 = vpack.c.b16 %v1069, %v1063
        %v1280 = vpack.c.b16 %v1070, %v1064
        %v1281 = vpack.c.b16 %v1071, %v1065
        %v1282 = vpack.c.b16 %v1078, %v1072
        %v1283 = vpack.c.b16 %v1079, %v1073
        %v1284 = vpack.c.b16 %v1080, %v1074
        %v1285 = vpack.c.b16 %v1081, %v1075
        %v1286 = vpack.c.b16 %v1082, %v1076
        %v1287 = vpack.c.b16 %v1083, %v1077
        %v1288 = vpack.c.b16 %v1090, %v1084
        %v1289 = vpack.c.b16 %v1091, %v1085
        %v1290 = vpack.c.b16 %v1092, %v1086
        %v1291 = vpack.c.b16 %v1093, %v1087
        %v1292 = vpack.c.b16 %v1094, %v1088
        %v1293 = vpack.c.b16 %v1095, %v1089
        %v1294 = vpack.c.b16 %v1102, %v1096
        %v1295 = vpack.c.b16 %v1103, %v1097
        %v1296 = vpack.c.b16 %v1104, %v1098
        %v1297 = vpack.c.b16 %v1105, %v1099
        %v1298 = vpack.c.b16 %v1106, %v1100
        %v1299 = vpack.c.b16 %v1107, %v1101
        %v1300 = vpack.c.b16 %v1114, %v1108
        %v1301 = vpack.c.b16 %v1115, %v1109
        %v1302 = vpack.c.b16 %v1116, %v1110
        %v1303 = vpack.c.b16 %v1117, %v1111
        %v1304 = vpack.c.b16 %v1118, %v1112
        %v1305 = vpack.c.b16 %v1119, %v1113
        %v1306 = vpack.c.b16 %v1126, %v1120
        %v1307 = vpack.c.b16 %v1127, %v1121
        %v1308 = vpack.c.b16 %v1128, %v1122
        %v1309 = vpack.c.b16 %v1129, %v1123
        %v1310 = vpack.c.b16 %v1130, %v1124
        %v1311 = vpack.c.b16 %v1131, %v1125
        %v1312 = vpack.c.b16 %v1138, %v1132
        %v1313 = vpack.c.b16 %v1139, %v1133
        %v1314 = vpack.c.b16 %v1140, %v1134
        %v1315 = vpack.c.b16 %v1141, %v1135
        %v1316 = vpack.c.b16 %v1142, %v1136
        %v1317 = vpack.c.b16 %v1143, %v1137
        %v1318 = vpack.c.b16 %v1150, %v1144
        %v1319 = vpack.c.b16 %v1151, %v1145
        %v1320 = vpack.c.b16 %v1152, %v1146
        %v1321 = vpack.c.b16 %v1153, %v1147
        %v1322 = vpack.c.b16 %v1154, %v1148
        %v1323 = vpack.c.b16 %v1155, %v1149
        %v1324 = vpack.c.b16 %v1162, %v1156
        %v1325 = vpack.c.b16 %v1163, %v1157
        %v1326 = vpack.c.b16 %v1164, %v1158
        %v1327 = vpack.c.b16 %v1165, %v1159
        %v1328 = vpack.c.b16 %v1166, %v1160
        %v1329 = vpack.c.b16 %v1167, %v1161
        %v1330 = vpack.c.b16 %v1174, %v1168
        %v1331 = vpack.c.b16 %v1175, %v1169
        %v1332 = vpack.c.b16 %v1176, %v1170
        %v1333 = vpack.c.b16 %v1177, %v1171
        %v1334 = vpack.c.b16 %v1178, %v1172
        %v1335 = vpack.c.b16 %v1179, %v1173
        %v1336 = vpack.c.b16 %v1186, %v1180
        %v1337 = vpack.c.b16 %v1187, %v1181
        %v1338 = vpack.c.b16 %v1188, %v1182
        %v1339 = vpack.c.b16 %v1189, %v1183
        %v1340 = vpack.c.b16 %v1190, %v1184
        %v1341 = vpack.c.b16 %v1191, %v1185
        %v1342 = vpack.c.b16 %v1198, %v1192
        %v1343 = vpack.c.b16 %v1199, %v1193
        %v1344 = vpack.c.b16 %v1200, %v1194
        %v1345 = vpack.c.b16 %v1201, %v1195
        %v1346 = vpack.c.b16 %v1202, %v1196
        %v1347 = vpack.c.b16 %v1203, %v1197
        %1492 = vmatprep.subr.bf16.mxu0 %v1205
        %1493 = vmatpush1.bf16.msra.mxu0 %v1204
        %1494 = vmatprep.subr.bf16.mxu0 %v1211
        %1495 = vmatpush1.bf16.msra.mxu0 %v1210
        %1496 = vmatprep.subr.bf16.mxu0 %v1217
        %1497 = vmatpush1.bf16.msra.mxu0 %v1216
        %1498 = vmatprep.subr.bf16.mxu0 %v1223
        %1499 = vmatpush1.bf16.msra.mxu0 %v1222
        %1500 = vmatprep.subr.bf16.mxu0 %v1229
        %1501 = vmatpush1.bf16.msra.mxu0 %v1228
        %1502 = vmatprep.subr.bf16.mxu0 %v1235
        %1503 = vmatpush1.bf16.msra.mxu0 %v1234
        %1504 = vmatprep.subr.bf16.mxu0 %v1241
        %1505 = vmatpush1.bf16.msra.mxu0 %v1240
        %1506 = vmatprep.subr.bf16.mxu0 %v1247
        %1507 = vmatpush1.bf16.msra.mxu0 %v1246
        %1508 = vmatprep.subr.bf16.mxu0 %v1253
        %1509 = vmatpush1.bf16.msra.mxu0 %v1252
        %1510 = vmatprep.subr.bf16.mxu0 %v1259
        %1511 = vmatpush1.bf16.msra.mxu0 %v1258
        %1512 = vmatprep.subr.bf16.mxu0 %v1265
        %1513 = vmatpush1.bf16.msra.mxu0 %v1264
        %1514 = vmatprep.subr.bf16.mxu0 %v1271
        %1515 = vmatpush1.bf16.msra.mxu0 %v1270
        %1516 = vmatprep.subr.bf16.mxu0 %v1277
        %1517 = vmatpush1.bf16.msra.mxu0 %v1276
        %1518 = vmatprep.subr.bf16.mxu0 %v1283
        %1519 = vmatpush1.bf16.msra.mxu0 %v1282
        %1520 = vmatprep.subr.bf16.mxu0 %v1289
        %1521 = vmatpush1.bf16.msra.mxu0 %v1288
        %1522 = vmatprep.subr.bf16.mxu0 %v1295
        %1523 = vmatpush1.bf16.msra.mxu0 %v1294
        %1524 = vmatprep.mubr.bf16.mxu0 %v594
        %1525 = vmatmul.mubr.bf16.gmra.mrb[0].mxu0 %v593
        %v1526 = vpop.f32.mrb[0].mxu0
        %v1527 = vadd.f32 %v745, %v1526
        %v1528 = vpop.f32.mrb[0].mxu0
        %v1529 = vadd.f32 %v749, %v1528
        %v1530 = vpop.f32.mrb[0].mxu0
        %v1531 = vpop.f32.mrb[0].mxu0
        %1532 = vdwg.mxu0
        %1533 = vmatprep.subr.bf16.mxu0 %v1301
        %1534 = vmatpush1.bf16.msra.mxu0 %v1300
        %1535 = vmatprep.subr.bf16.mxu0 %v1307
        %1536 = vmatpush1.bf16.msra.mxu0 %v1306
        %1537 = vmatprep.subr.bf16.mxu0 %v1313
        %1538 = vmatpush1.bf16.msra.mxu0 %v1312
        %1539 = vmatprep.subr.bf16.mxu0 %v1319
        %1540 = vmatpush1.bf16.msra.mxu0 %v1318
        %1541 = vmatprep.subr.bf16.mxu0 %v1325
        %1542 = vmatpush1.bf16.msra.mxu0 %v1324
        %1543 = vmatprep.subr.bf16.mxu0 %v1331
        %1544 = vmatpush1.bf16.msra.mxu0 %v1330
        %1545 = vmatprep.subr.bf16.mxu0 %v1337
        %1546 = vmatpush1.bf16.msra.mxu0 %v1336
        %1547 = vmatprep.subr.bf16.mxu0 %v1343
        %1548 = vmatpush1.bf16.msra.mxu0 %v1342
        %1549 = vmatprep.subr.bf16.mxu0 0
        %1550 = vmatpush1.bf16.msra.mxu0 0
        %1551 = vmatprep.subr.bf16.mxu0 0
        %1552 = vmatpush1.bf16.msra.mxu0 0
        %1553 = vmatprep.subr.bf16.mxu0 0
        %1554 = vmatpush1.bf16.msra.mxu0 0
        %1555 = vmatprep.subr.bf16.mxu0 0
        %1556 = vmatpush1.bf16.msra.mxu0 0
        %1557 = vmatprep.subr.bf16.mxu0 0
        %1558 = vmatpush1.bf16.msra.mxu0 0
        %1559 = vmatprep.subr.bf16.mxu0 0
        %1560 = vmatpush1.bf16.msra.mxu0 0
        %1561 = vmatprep.subr.bf16.mxu0 0
        %1562 = vmatpush1.bf16.msra.mxu0 0
        %1563 = vmatprep.subr.bf16.mxu0 0
        %1564 = vmatpush1.bf16.msra.mxu0 0
        %1565 = vmatprep.mubr.bf16.mxu0 0
        %1566 = vmatmul.mubr.bf16.gmra.mrb[0].mxu0 %v595
        %v1567 = vpop.f32.mrb[0].mxu0
        %v1568 = vadd.f32 %v1527, %v1567
        %v1569 = vpop.f32.mrb[0].mxu0
        %v1570 = vadd.f32 %v1529, %v1569
        %v1571 = vpop.f32.mrb[0].mxu0
        %v1572 = vpop.f32.mrb[0].mxu0
        %1573 = vdwg.mxu0
        %1574 = vmatprep.subr.bf16.mxu0 %v1207
        %1575 = vmatpush1.bf16.msra.mxu0 %v1206
        %1576 = vmatprep.subr.bf16.mxu0 %v1213
        %1577 = vmatpush1.bf16.msra.mxu0 %v1212
        %1578 = vmatprep.subr.bf16.mxu0 %v1219
        %1579 = vmatpush1.bf16.msra.mxu0 %v1218
        %1580 = vmatprep.subr.bf16.mxu0 %v1225
        %1581 = vmatpush1.bf16.msra.mxu0 %v1224
        %1582 = vmatprep.subr.bf16.mxu0 %v1231
        %1583 = vmatpush1.bf16.msra.mxu0 %v1230
        %1584 = vmatprep.subr.bf16.mxu0 %v1237
        %1585 = vmatpush1.bf16.msra.mxu0 %v1236
        %1586 = vmatprep.subr.bf16.mxu0 %v1243
        %1587 = vmatpush1.bf16.msra.mxu0 %v1242
        %1588 = vmatprep.subr.bf16.mxu0 %v1249
        %1589 = vmatpush1.bf16.msra.mxu0 %v1248
        %1590 = vmatprep.subr.bf16.mxu0 %v1255
        %1591 = vmatpush1.bf16.msra.mxu0 %v1254
        %1592 = vmatprep.subr.bf16.mxu0 %v1261
        %1593 = vmatpush1.bf16.msra.mxu0 %v1260
        %1594 = vmatprep.subr.bf16.mxu0 %v1267
        %1595 = vmatpush1.bf16.msra.mxu0 %v1266
        %1596 = vmatprep.subr.bf16.mxu0 %v1273
        %1597 = vmatpush1.bf16.msra.mxu0 %v1272
        %1598 = vmatprep.subr.bf16.mxu0 %v1279
        %1599 = vmatpush1.bf16.msra.mxu0 %v1278
        %1600 = vmatprep.subr.bf16.mxu0 %v1285
        %1601 = vmatpush1.bf16.msra.mxu0 %v1284
        %1602 = vmatprep.subr.bf16.mxu0 %v1291
        %1603 = vmatpush1.bf16.msra.mxu0 %v1290
        %1604 = vmatprep.subr.bf16.mxu0 %v1297
        %1605 = vmatpush1.bf16.msra.mxu0 %v1296
        %1606 = vmatprep.mubr.bf16.mxu0 %v594
        %1607 = vmatmul.mubr.bf16.gmra.mrb[0].mxu0 %v593
        %v1608 = vpop.f32.mrb[0].mxu0
        %v1609 = vadd.f32 %v753, %v1608
        %v1610 = vpop.f32.mrb[0].mxu0
        %v1611 = vadd.f32 %v757, %v1610
        %v1612 = vpop.f32.mrb[0].mxu0
        %v1613 = vpop.f32.mrb[0].mxu0
        %1614 = vdwg.mxu0
        %1615 = vmatprep.subr.bf16.mxu0 %v1303
        %1616 = vmatpush1.bf16.msra.mxu0 %v1302
        %1617 = vmatprep.subr.bf16.mxu0 %v1309
        %1618 = vmatpush1.bf16.msra.mxu0 %v1308
        %1619 = vmatprep.subr.bf16.mxu0 %v1315
        %1620 = vmatpush1.bf16.msra.mxu0 %v1314
        %1621 = vmatprep.subr.bf16.mxu0 %v1321
        %1622 = vmatpush1.bf16.msra.mxu0 %v1320
        %1623 = vmatprep.subr.bf16.mxu0 %v1327
        %1624 = vmatpush1.bf16.msra.mxu0 %v1326
        %1625 = vmatprep.subr.bf16.mxu0 %v1333
        %1626 = vmatpush1.bf16.msra.mxu0 %v1332
        %1627 = vmatprep.subr.bf16.mxu0 %v1339
        %1628 = vmatpush1.bf16.msra.mxu0 %v1338
        %1629 = vmatprep.subr.bf16.mxu0 %v1345
        %1630 = vmatpush1.bf16.msra.mxu0 %v1344
        %1631 = vmatprep.subr.bf16.mxu0 0
        %1632 = vmatpush1.bf16.msra.mxu0 0
        %1633 = vmatprep.subr.bf16.mxu0 0
        %1634 = vmatpush1.bf16.msra.mxu0 0
        %1635 = vmatprep.subr.bf16.mxu0 0
        %1636 = vmatpush1.bf16.msra.mxu0 0
        %1637 = vmatprep.subr.bf16.mxu0 0
        %1638 = vmatpush1.bf16.msra.mxu0 0
        %1639 = vmatprep.subr.bf16.mxu0 0
        %1640 = vmatpush1.bf16.msra.mxu0 0
        %1641 = vmatprep.subr.bf16.mxu0 0
        %1642 = vmatpush1.bf16.msra.mxu0 0
        %1643 = vmatprep.subr.bf16.mxu0 0
        %1644 = vmatpush1.bf16.msra.mxu0 0
        %1645 = vmatprep.subr.bf16.mxu0 0
        %1646 = vmatpush1.bf16.msra.mxu0 0
        %1647 = vmatprep.mubr.bf16.mxu0 0
        %1648 = vmatmul.mubr.bf16.gmra.mrb[0].mxu0 %v595
        %v1649 = vpop.f32.mrb[0].mxu0
        %v1650 = vadd.f32 %v1609, %v1649
        %v1651 = vpop.f32.mrb[0].mxu0
        %v1652 = vadd.f32 %v1611, %v1651
        %v1653 = vpop.f32.mrb[0].mxu0
        %v1654 = vpop.f32.mrb[0].mxu0
        %1655 = vdwg.mxu0
        %1656 = vmatprep.subr.bf16.mxu0 %v1209
        %1657 = vmatpush1.bf16.msra.mxu0 %v1208
        %1658 = vmatprep.subr.bf16.mxu0 %v1215
        %1659 = vmatpush1.bf16.msra.mxu0 %v1214
        %1660 = vmatprep.subr.bf16.mxu0 %v1221
        %1661 = vmatpush1.bf16.msra.mxu0 %v1220
        %1662 = vmatprep.subr.bf16.mxu0 %v1227
        %1663 = vmatpush1.bf16.msra.mxu0 %v1226
        %1664 = vmatprep.subr.bf16.mxu0 %v1233
        %1665 = vmatpush1.bf16.msra.mxu0 %v1232
        %1666 = vmatprep.subr.bf16.mxu0 %v1239
        %1667 = vmatpush1.bf16.msra.mxu0 %v1238
        %1668 = vmatprep.subr.bf16.mxu0 %v1245
        %1669 = vmatpush1.bf16.msra.mxu0 %v1244
        %1670 = vmatprep.subr.bf16.mxu0 %v1251
        %1671 = vmatpush1.bf16.msra.mxu0 %v1250
        %1672 = vmatprep.subr.bf16.mxu0 %v1257
        %1673 = vmatpush1.bf16.msra.mxu0 %v1256
        %1674 = vmatprep.subr.bf16.mxu0 %v1263
        %1675 = vmatpush1.bf16.msra.mxu0 %v1262
        %1676 = vmatprep.subr.bf16.mxu0 %v1269
        %1677 = vmatpush1.bf16.msra.mxu0 %v1268
        %1678 = vmatprep.subr.bf16.mxu0 %v1275
        %1679 = vmatpush1.bf16.msra.mxu0 %v1274
        %1680 = vmatprep.subr.bf16.mxu0 %v1281
        %1681 = vmatpush1.bf16.msra.mxu0 %v1280
        %1682 = vmatprep.subr.bf16.mxu0 %v1287
        %1683 = vmatpush1.bf16.msra.mxu0 %v1286
        %1684 = vmatprep.subr.bf16.mxu0 %v1293
        %1685 = vmatpush1.bf16.msra.mxu0 %v1292
        %1686 = vmatprep.subr.bf16.mxu0 %v1299
        %1687 = vmatpush1.bf16.msra.mxu0 %v1298
        %1688 = vmatprep.mubr.bf16.mxu0 %v594
        %1689 = vmatmul.mubr.bf16.gmra.mrb[0].mxu0 %v593
        %v1690 = vpop.f32.mrb[0].mxu0
        %v1691 = vadd.f32 %v761, %v1690
        %v1692 = vpop.f32.mrb[0].mxu0
        %v1693 = vadd.f32 %v765, %v1692
        %v1694 = vpop.f32.mrb[0].mxu0
        %v1695 = vpop.f32.mrb[0].mxu0
        %1696 = vdwg.mxu0
        %1697 = vmatprep.subr.bf16.mxu0 %v1305
        %1698 = vmatpush1.bf16.msra.mxu0 %v1304
        %1699 = vmatprep.subr.bf16.mxu0 %v1311
        %1700 = vmatpush1.bf16.msra.mxu0 %v1310
        %1701 = vmatprep.subr.bf16.mxu0 %v1317
        %1702 = vmatpush1.bf16.msra.mxu0 %v1316
        %1703 = vmatprep.subr.bf16.mxu0 %v1323
        %1704 = vmatpush1.bf16.msra.mxu0 %v1322
        %1705 = vmatprep.subr.bf16.mxu0 %v1329
        %1706 = vmatpush1.bf16.msra.mxu0 %v1328
        %1707 = vmatprep.subr.bf16.mxu0 %v1335
        %1708 = vmatpush1.bf16.msra.mxu0 %v1334
        %1709 = vmatprep.subr.bf16.mxu0 %v1341
        %1710 = vmatpush1.bf16.msra.mxu0 %v1340
        %1711 = vmatprep.subr.bf16.mxu0 %v1347
        %1712 = vmatpush1.bf16.msra.mxu0 %v1346
        %1713 = vmatprep.subr.bf16.mxu0 0
        %1714 = vmatpush1.bf16.msra.mxu0 0
        %1715 = vmatprep.subr.bf16.mxu0 0
        %1716 = vmatpush1.bf16.msra.mxu0 0
        %1717 = vmatprep.subr.bf16.mxu0 0
        %1718 = vmatpush1.bf16.msra.mxu0 0
        %1719 = vmatprep.subr.bf16.mxu0 0
        %1720 = vmatpush1.bf16.msra.mxu0 0
        %1721 = vmatprep.subr.bf16.mxu0 0
        %1722 = vmatpush1.bf16.msra.mxu0 0
        %1723 = vmatprep.subr.bf16.mxu0 0
        %1724 = vmatpush1.bf16.msra.mxu0 0
        %1725 = vmatprep.subr.bf16.mxu0 0
        %1726 = vmatpush1.bf16.msra.mxu0 0
        %1727 = vmatprep.subr.bf16.mxu0 0
        %1728 = vmatpush1.bf16.msra.mxu0 0
        %1729 = vmatprep.mubr.bf16.mxu0 0
        %1730 = vmatmul.mubr.bf16.gmra.mrb[0].mxu0 %v595
        %v1731 = vpop.f32.mrb[0].mxu0
        %v1732 = vadd.f32 %v1691, %v1731
        %v1733 = vpop.f32.mrb[0].mxu0
        %v1734 = vadd.f32 %v1693, %v1733
        %v1735 = vpop.f32.mrb[0].mxu0
        %v1736 = vpop.f32.mrb[0].mxu0
        %1737 = vdwg.mxu0
        %v1738 = vxor.u32 %v1568, 2147483648
        %v1739 = vmul.f32 %v1738, 1.442695
        %v1740 = vpow.pop %v1739
        %v1741 = vadd.f32 %v1740, 1.0
        %v1742 = vrcp.pop %v1741
        %v1743 = vmul.f32 1.0, %v1742
        %v1744 = vxor.u32 %v1570, 2147483648
        %v1745 = vmul.f32 %v1744, 1.442695
        %v1746 = vpow.pop %v1745
        %v1747 = vadd.f32 %v1746, 1.0
        %v1748 = vrcp.pop %v1747
        %v1749 = vmul.f32 1.0, %v1748
        %v1750 = vxor.u32 %v1650, 2147483648
        %v1751 = vmul.f32 %v1750, 1.442695
        %v1752 = vpow.pop %v1751
        %v1753 = vadd.f32 %v1752, 1.0
        %v1754 = vrcp.pop %v1753
        %v1755 = vmul.f32 1.0, %v1754
        %v1756 = vxor.u32 %v1732, 2147483648
        %v1757 = vxor.u32 %v1734, 2147483648
        %v1758 = vmul.f32 %v1756, 1.442695
        %v1759 = vpow.pop %v1758
        %v1760 = vmul.f32 %v1757, 1.442695
        %v1761 = vpow.pop %v1760
        %v1762 = vadd.f32 %v1759, 1.0
        %v1763 = vadd.f32 %v1761, 1.0
        %v1764 = vrcp.pop %v1762
        %v1765 = vmul.f32 1.0, %v1764
        %v1766 = vrcp.pop %v1763
        %v1767 = vmul.f32 1.0, %v1766
        %v1768 = vld [vmem:[%s575] sm:$0xff]
        %1770 = vset.pattern.permute.xlu0 0
        %1771 = vperm.xlu0 %1770, %v1768
        %v1772 = vpop.permute.xlu0 %1771
        %v1774 = vld [vmem:[%s476] sm:$0xff]
        %v1775 = vmul.f32 %v1749, %v1774
        %v1776 = vtanh.pop %v1652
        %v1777 = vmul.f32 %v1743, %v1776
        %v1778 = vadd.f32 %v1775, %v1777
        %v1779 = vmul.f32 %v1778, %v1772
        %v1780 = vtanh.pop %v1779
        %v1781 = vmul.f32 %v1780, %v1772
        %v1782 = vmul.f32 %v1755, %v1781
        %1783 = vst [vmem:[%s557] sm:$0xff] %v1782
        %1784 = vst [vmem:[%s564] sm:$0xff] %v1779
        %v1785 = vmul.f32 %v1765, %v1781
        %v1786 = vmul.f32 %v1767, %v1781
        %1787 = vst [vmem:[%s571] sm:$0xff] %v1785
        %1788 = vst [vmem:[%s571 + $0x8] sm:$0xff] %v1786
        %s1789 = sadd.s32 %s42, 1
        %p1790 = scmp.lt.s32.totalorder %s1789, 2
        // Predicated region
        $region77: #{tpu_custom_call.1} parent=47 // pred_check
          %p1791 = pneg %p1790
        $region78: #{tpu_custom_call.1} parent=47 // pred_check_branch
          %1793 = sbr.rel (%p1791) target = $region80
        $region79: #{tpu_custom_call.1} parent=47 // pred_region
          %1794 = vst [vmem:[#allocation2] sm:$0xff] %v1782
        $region80: #{tpu_custom_call.1} parent=47 // pred_fallthru
          _
        %s1795 = sand.u32 %s247, 1
        %s1796 = scalar_lea.sflag [#allocation5], %s1795
        %s1797 = sand.u32 %s247, 1
        %s1798 = smul.addr %s1797, 8
        %s1799 = scalar_lea.vmem [#allocation14], %s1798
        %s1800 = sand.u32 %s37, 1
        %s1801 = scalar_lea.sflag [#allocation16], %s1800
        %s1802 = sand.u32 %s275, 1
        %s1803 = smul.addr %s1802, 8
        %s1804 = scalar_lea.vmem [#allocation15], %s1803
        %s1805 = sand.u32 %s37, 1
        %s1806 = scalar_lea.sflag [#allocation16], %s1805
        %s1807 = sand.u32 %s303, 1
        %s1808 = smul.addr %s1807, 16
        %s1809 = scalar_lea.vmem [#allocation17], %s1808
        // Predicated region
        $region81: #{tpu_custom_call.1} parent=47 // pred_check
          %p1810 = pneg %p257
        $region82: #{tpu_custom_call.1} parent=47 // pred_check_branch
          %1812 = sbr.rel (%p1810) target = $region84
        $region83: #{tpu_custom_call.1} parent=47 // pred_region
          %s1814 = ssub.s32 128, 128
          %1815 = vsyncadd %s1796, %s1814
          %s1816 = sadd.s32 %s41, %s42
          %s1817 = smul.addr %s1816, 128
          %s1818 = scalar_lea.hbm %s7, %s1817
          %s1820 = sshll.u32 %s1799, 4
          %s1821 = int_to_ptr.vmem [resolvable:$true] %s1820
          %1823 = dma.vmem_to_hbm [thread:$0]  %s1821, 128, %s1818, %s1796
        $region84: #{tpu_custom_call.1} parent=47 // pred_fallthru
          _
        // Predicated region
        $region85: #{tpu_custom_call.1} parent=47 // pred_check
          %p1824 = pneg %p285
        $region86: #{tpu_custom_call.1} parent=47 // pred_check_branch
          %1826 = sbr.rel (%p1824) target = $region88
        $region87: #{tpu_custom_call.1} parent=47 // pred_region
          %s1828 = ssub.s32 128, 128
          %1829 = vsyncadd %s1801, %s1828
          %s1830 = sadd.s32 %s41, %s42
          %s1831 = smul.addr %s1830, 128
          %s1832 = scalar_lea.hbm %s8, %s1831
          %s1834 = sshll.u32 %s1804, 4
          %s1835 = int_to_ptr.vmem [resolvable:$true] %s1834
          %1837 = dma.vmem_to_hbm [thread:$0]  %s1835, 128, %s1832, %s1801
        $region88: #{tpu_custom_call.1} parent=47 // pred_fallthru
          _
        // Predicated region
        $region89: #{tpu_custom_call.1} parent=47 // pred_check
          %p1838 = pneg %p313
        $region90: #{tpu_custom_call.1} parent=47 // pred_check_branch
          %1840 = sbr.rel (%p1838) target = $region92
        $region91: #{tpu_custom_call.1} parent=47 // pred_region
          %s1842 = ssub.s32 256, 256
          %1843 = vsyncadd %s1806, %s1842
          %s1844 = smul.addr %s41, 2
          %s1845 = smul.addr %s42, 2
          %s1846 = sadd.s32 %s1844, %s1845
          %s1847 = smul.addr %s1846, 128
          %s1848 = scalar_lea.hbm %s9, %s1847
          %s1850 = sshll.u32 %s1809, 4
          %s1851 = int_to_ptr.vmem [resolvable:$true] %s1850
          %1853 = dma.vmem_to_hbm [thread:$0]  %s1851, 256, %s1848, %s1806
        $region92: #{tpu_custom_call.1} parent=47 // pred_fallthru
          _
      $region48: #{tpu_custom_call.1} parent=5 // pred_fallthru
        _
      %p1854 = scmp.le.s32.totalorder 2, %s32
      // Predicated region
      $region93: #{tpu_custom_call.1} parent=5 // pred_check
        %p1855 = pneg %p1854
      $region94: #{tpu_custom_call.1} parent=5 // pred_check_branch
        %1857 = sbr.rel (%p1855) target = $region96
      $region95: #{tpu_custom_call.1} parent=5 // pred_region
        %s1858 = ssub.s32 %s32, 2
        // Predicated region
        $region97: #{tpu_custom_call.1} parent=95 // pred_check
          %p1859 = pneg %p263
        $region98: #{tpu_custom_call.1} parent=95 // pred_check_branch
          %1861 = sbr.rel (%p1859) target = $region100
        $region99: #{tpu_custom_call.1} parent=95 // pred_region
          %s1862 = sand.u32 %s248, 1
          %s1863 = scalar_lea.sflag [#allocation5], %s1862
          %s1864 = sand.u32 %s248, 1
          %s1865 = smul.addr %s1864, 8
          %s1866 = scalar_lea.vmem [#allocation14], %s1865
          %1867 = dma.done %s1863, 128
        $region100: #{tpu_custom_call.1} parent=95 // pred_fallthru
          _
        // Predicated region
        $region101: #{tpu_custom_call.1} parent=95 // pred_check
          %p1868 = pneg %p291
        $region102: #{tpu_custom_call.1} parent=95 // pred_check_branch
          %1870 = sbr.rel (%p1868) target = $region104
        $region103: #{tpu_custom_call.1} parent=95 // pred_region
          %s1871 = sand.u32 %s38, 1
          %s1872 = scalar_lea.sflag [#allocation16], %s1871
          %s1873 = sand.u32 %s276, 1
          %s1874 = smul.addr %s1873, 8
          %s1875 = scalar_lea.vmem [#allocation15], %s1874
          %1876 = dma.done %s1872, 128
        $region104: #{tpu_custom_call.1} parent=95 // pred_fallthru
          _
        // Predicated region
        $region105: #{tpu_custom_call.1} parent=95 // pred_check
          %p1877 = pneg %p319
        $region106: #{tpu_custom_call.1} parent=95 // pred_check_branch
          %1879 = sbr.rel (%p1877) target = $region108
        $region107: #{tpu_custom_call.1} parent=95 // pred_region
          %s1880 = sand.u32 %s38, 1
          %s1881 = scalar_lea.sflag [#allocation16], %s1880
          %s1882 = sand.u32 %s304, 1
          %s1883 = smul.addr %s1882, 16
          %s1884 = scalar_lea.vmem [#allocation17], %s1883
          %1885 = dma.done %s1881, 256
        $region108: #{tpu_custom_call.1} parent=95 // pred_fallthru
          _
      $region96: #{tpu_custom_call.1} parent=5 // pred_fallthru
        _
    $region6: #{tpu_custom_call.1} parent=1 // loop_footer
      %s36 = sadd.s32 1, %s32
    $region7: #{tpu_custom_call.1} parent=1 // loop_footer_branch
      %31 = sbr.rel target = $region3
    $region8: #{tpu_custom_call.1} parent=1 // loop_exit
      _
    %1886 = vsyncpa [#allocation4], 1
    %s1887 = scalar_lea.sflag [#allocation4], 1
    %1888 = vsyncpa %s1887, 1
    %1889 = vsyncpa [#allocation7], 1
    %s1890 = scalar_lea.sflag [#allocation7], 1
    %1891 = vsyncpa %s1890, 1
    %1892 = vsyncpa [#allocation10], 1
    %s1893 = scalar_lea.sflag [#allocation10], 1
    %1894 = vsyncpa %s1893, 1
    %1895 = vsyncpa [#allocation13], 1
    %s1896 = scalar_lea.sflag [#allocation13], 1
    %1897 = vsyncpa %s1896, 1
    %1898 = vsyncpa [#allocation5], 1
    %s1899 = scalar_lea.sflag [#allocation5], 1
    %1900 = vsyncpa %s1899, 1
    %1901 = vsyncpa [#allocation16], 1
    %s1902 = scalar_lea.sflag [#allocation16], 1
    %1903 = vsyncpa %s1902, 1

</llo_original>
